<compile_context>
chip_gen: v7x
topology: tpu7x:2x2x1
jax: 0.10.0
libtpu: 0.0.40
codegen_flags: <defaults>
</compile_context>

<pallas_src>
import functools

import jax
import jax.numpy as jnp
from jax import lax
from jax.experimental import pallas as pl
from jax.experimental.pallas import tpu as pltpu

BN_EPS = 1e-5
NEG_SLOPE = 0.1


def _round_up(x, m):
    return (x + m - 1) // m * m


# ---------------- pass 1: conv tile + per-channel partial sum / sum-of-squares ----
def _stats_kernel(patches_ref, w_ref, stats_ref):
    # patches_ref: [TM, Kp] bf16, w_ref: [Kp, Cp] bf16, stats_ref: [1, 8, Cp] f32
    conv = jnp.dot(patches_ref[...], w_ref[...],
                   preferred_element_type=jnp.float32)          # MXU, f32 accum
    s = jnp.sum(conv, axis=0, keepdims=True)                    # [1, Cp]
    ss = jnp.sum(conv * conv, axis=0, keepdims=True)            # [1, Cp]
    pad = jnp.zeros((6, conv.shape[1]), jnp.float32)
    stats_ref[...] = jnp.concatenate([s, ss, pad], axis=0)[None]  # rows 0/1 used


# ---------------- pass 2: conv tile + fused BN affine + LeakyReLU ------------------
def _apply_kernel(patches_ref, w_ref, scale_ref, bias_ref, o_ref):
    conv = jnp.dot(patches_ref[...], w_ref[...],
                   preferred_element_type=jnp.float32)          # [TM, Cp]
    y = conv * scale_ref[...] + bias_ref[...]
    o_ref[...] = jnp.where(y > 0, y, NEG_SLOPE * y)


def _im2col_nchw(x, kh, kw, stride, pad):
    """Glue: NCHW -> [N*OH*OW, C*KH*KW] patch matrix (matches PyTorch weight flattening)."""
    n, c, h, w = x.shape
    xp = jnp.pad(x, ((0, 0), (0, 0), (pad, pad), (pad, pad)))
    oh = (h + 2 * pad - kh) // stride + 1
    ow = (w + 2 * pad - kw) // stride + 1
    cols = []
    for i in range(kh):
        for j in range(kw):
            cols.append(xp[:, :, i:i + stride * oh:stride, j:j + stride * ow:stride])
    patches = jnp.stack(cols, axis=2)                              # [N, C, KH*KW, OH, OW]
    patches = patches.transpose(0, 3, 4, 1, 2).reshape(n * oh * ow, c * kh * kw)
    return patches, oh, ow


@functools.partial(jax.jit, static_argnames=("stride", "pad"))
def cnn_block(x_nchw, conv_weight, bn_gamma, bn_beta, *, stride=1, pad=1):
    """x_nchw: [N, Cin, H, W]; conv_weight: [Cout, Cin, KH, KW] (PyTorch layout)."""
    n, cin, h, w = x_nchw.shape
    cout, cin_w, kh, kw = conv_weight.shape
    assert cin == cin_w

    # bf16 BEFORE im2col: the duplicated patch matrix is half-size in HBM.
    patches, oh, ow = _im2col_nchw(x_nchw.astype(jnp.bfloat16), kh, kw, stride, pad)
    m, k = patches.shape

    # Lane/sublane-friendly padding.
    cout_p = _round_up(cout, 128)
    k_p = _round_up(k, 8)
    tile_m = min(512, _round_up(m, 16))          # biggest pipelined tile that is cheap
    m_p = _round_up(m, tile_m)
    n_tiles = m_p // tile_m

    patches_p = jnp.pad(patches, ((0, m_p - m), (0, k_p - k)))
    w_mat = conv_weight.reshape(cout, cin * kh * kw).T.astype(jnp.bfloat16)  # [K, Cout]
    w_p = jnp.pad(w_mat, ((0, k_p - k), (0, cout_p - cout)))

    # ---- pass 1: per-tile partial stats of the conv output over rows (N,H,W) ----
    stats = pl.pallas_call(
        _stats_kernel,
        out_shape=jax.ShapeDtypeStruct((n_tiles, 8, cout_p), jnp.float32),
        grid=(n_tiles,),
        in_specs=[
            pl.BlockSpec((tile_m, k_p), lambda i: (i, 0)),
            pl.BlockSpec((k_p, cout_p), lambda i: (0, 0)),
        ],
        out_specs=pl.BlockSpec((1, 8, cout_p), lambda i: (i, 0, 0)),
        compiler_params=pltpu.CompilerParams(dimension_semantics=("parallel",)),
    )(patches_p, w_p)

    # Tiny cross-tile combine + fold BN params into an affine (all in f32).
    s = jnp.sum(stats[:, 0, :], axis=0)                    # [Cp]
    ss = jnp.sum(stats[:, 1, :], axis=0)                   # [Cp]
    mean = s / m                                           # padded rows contribute 0
    var = jnp.maximum(ss / m - mean * mean, 0.0)           # biased var (training BN)
    gamma_p = jnp.pad(bn_gamma.astype(jnp.float32), (0, cout_p - cout), constant_values=1.0)
    beta_p = jnp.pad(bn_beta.astype(jnp.float32), (0, cout_p - cout))
    scale = (gamma_p * lax.rsqrt(var + BN_EPS)).reshape(1, cout_p)
    bias = (beta_p - mean * gamma_p * lax.rsqrt(var + BN_EPS)).reshape(1, cout_p)

    # ---- pass 2: recompute conv per tile, apply folded BN + LeakyReLU ----
    out_flat = pl.pallas_call(
        _apply_kernel,
        out_shape=jax.ShapeDtypeStruct((m_p, cout_p), jnp.float32),
        grid=(n_tiles,),
        in_specs=[
            pl.BlockSpec((tile_m, k_p), lambda i: (i, 0)),
            pl.BlockSpec((k_p, cout_p), lambda i: (0, 0)),
            pl.BlockSpec((1, cout_p), lambda i: (0, 0)),
            pl.BlockSpec((1, cout_p), lambda i: (0, 0)),
        ],
        out_specs=pl.BlockSpec((tile_m, cout_p), lambda i: (i, 0)),
        compiler_params=pltpu.CompilerParams(dimension_semantics=("parallel",)),
    )(patches_p, w_p, scale, bias)

    out = out_flat[:m, :cout]                              # drop M / Cout padding
    return out.reshape(n, oh, ow, cout).transpose(0, 3, 1, 2)   # -> NCHW


def _reference(x_nchw, conv_weight, bn_gamma, bn_beta, stride, pad):
    """Pure-JAX f32 reference."""
    conv = lax.conv_general_dilated(
        x_nchw, conv_weight, window_strides=(stride, stride),
        padding=[(pad, pad), (pad, pad)],
        dimension_numbers=("NCHW", "OIHW", "NCHW"),
    )
    mean = jnp.mean(conv, axis=(0, 2, 3), keepdims=True)
    var = jnp.mean((conv - mean) ** 2, axis=(0, 2, 3), keepdims=True)
    xn = (conv - mean) / jnp.sqrt(var + BN_EPS)
    y = xn * bn_gamma.reshape(1, -1, 1, 1) + bn_beta.reshape(1, -1, 1, 1)
    return jnp.where(y > 0, y, NEG_SLOPE * y)


def _check(n, cin, hw, cout, khw, stride, pad, key):
    kx, kw_, kg, kb = jax.random.split(key, 4)
    x = jax.random.normal(kx, (n, cin, hw, hw), dtype=jnp.float32)
    conv_w = 0.1 * jax.random.normal(kw_, (cout, cin, khw, khw), dtype=jnp.float32)
    gamma = 1.0 + 0.1 * jax.random.normal(kg, (cout,), dtype=jnp.float32)
    beta = 0.1 * jax.random.normal(kb, (cout,), dtype=jnp.float32)

    out = jax.block_until_ready(cnn_block(x, conv_w, gamma, beta, stride=stride, pad=pad))
    ref = _reference(x, conv_w, gamma, beta, stride, pad)
    assert out.shape == ref.shape
    # bf16 matmul inputs vs f32 reference -> modest tolerance.
    assert jnp.allclose(out, ref, atol=2e-2, rtol=2e-2), "mismatch vs reference"


if __name__ == "__main__":
    key = jax.random.PRNGKey(0)
    k1, k2 = jax.random.split(key)
    # CNNBlock(4, 8, kernel_size=3, stride=1, padding=1) on [2, 4, 16, 16].
    _check(n=2, cin=4, hw=16, cout=8, khw=3, stride=1, pad=1, key=k1)
    # Second shape exercises multi-tile grid + M-padding path (M = 1152 -> 3 tiles).
    _check(n=2, cin=4, hw=24, cout=8, khw=3, stride=1, pad=1, key=k2)
    print("KERNEL_OK")
</pallas_src>

<mosaic_0001>
module attributes {stable_mosaic.version = 11 : i64} {
  func.func @_stats_kernel(%arg0: i32, %arg1: memref<512x40xbf16, #tpu.memory_space<vmem>>, %arg2: memref<40x128xbf16, #tpu.memory_space<vmem>>, %arg3: memref<1x8x128xf32, #tpu.memory_space<vmem>>) attributes {dimension_semantics = [#tpu.dimension_semantics<parallel>], iteration_bounds = array<i64: 1>, scalar_prefetch = 0 : i64, scratch_operands = 0 : i64, tpu.core_type = #tpu.core_type<tc>, window_params = [{transform_indices = @transform_0, window_bounds = array<i64: 512, 40>}, {pipeline_mode = #tpu.pipeline_mode<synchronous>, transform_indices = @transform_1, window_bounds = array<i64: 40, 128>}, {transform_indices = @transform_2, window_bounds = array<i64: 1, 8, 128>}]} {
    %c0 = arith.constant 0 : index
    %c0_0 = arith.constant 0 : index
    %0 = vector.load %arg1[%c0, %c0_0] : memref<512x40xbf16, #tpu.memory_space<vmem>>, vector<512x40xbf16>
    %c0_1 = arith.constant 0 : index
    %c0_2 = arith.constant 0 : index
    %1 = vector.load %arg2[%c0_1, %c0_2] : memref<40x128xbf16, #tpu.memory_space<vmem>>, vector<40x128xbf16>
    %cst = arith.constant dense<0.000000e+00> : vector<512x128xf32>
    %2 = tpu.matmul %0, %1, %cst {dimension_numbers = #tpu.dot_dimension_numbers<[1], [0], [0], [1], [0, 0, 1, 1], [], []>} : vector<512x40xbf16>, vector<40x128xbf16>, vector<512x128xf32> -> vector<512x128xf32>
    %cst_3 = arith.constant dense<0.000000e+00> : vector<128xf32>
    %3 = vector.multi_reduction <add>, %2, %cst_3 [0] : vector<512x128xf32> to vector<128xf32>
    %4 = vector.shape_cast %3 : vector<128xf32> to vector<1x128xf32>
    %5 = arith.mulf %2, %2 : vector<512x128xf32>
    %cst_4 = arith.constant dense<0.000000e+00> : vector<128xf32>
    %6 = vector.multi_reduction <add>, %5, %cst_4 [0] : vector<512x128xf32> to vector<128xf32>
    %7 = vector.shape_cast %6 : vector<128xf32> to vector<1x128xf32>
    %cst_5 = arith.constant 0.000000e+00 : f32
    %8 = vector.broadcast %cst_5 : f32 to vector<6x128xf32>
    %9 = tpu.concatenate %4, %7, %8 in 0 : vector<1x128xf32>, vector<1x128xf32>, vector<6x128xf32> -> vector<8x128xf32>
    %10 = vector.shape_cast %9 : vector<8x128xf32> to vector<1x8x128xf32>
    %c0_6 = arith.constant 0 : index
    %c0_7 = arith.constant 0 : index
    %c0_8 = arith.constant 0 : index
    %11 = vector.load %arg3[%c0_6, %c0_7, %c0_8] : memref<1x8x128xf32, #tpu.memory_space<vmem>>, vector<1x8x128xf32>
    tpu.vector_store %arg3[%c0_6, %c0_7, %c0_8], %10 {strides = array<i32>} : memref<1x8x128xf32, #tpu.memory_space<vmem>>, vector<1x8x128xf32>,
    return
  }
  func.func @transform_0(%arg0: i32) -> (i32, i32) {
    %c0_i32 = arith.constant 0 : i32
    %c0_i32_0 = arith.constant 0 : i32
    return %arg0, %c0_i32 : i32, i32
  }
  func.func @transform_1(%arg0: i32) -> (i32, i32) {
    %c0_i32 = arith.constant 0 : i32
    %c0_i32_0 = arith.constant 0 : i32
    %c0_i32_1 = arith.constant 0 : i32
    return %c0_i32, %c0_i32_0 : i32, i32
  }
  func.func @transform_2(%arg0: i32) -> (i32, i32, i32) {
    %c0_i32 = arith.constant 0 : i32
    %c0_i32_0 = arith.constant 0 : i32
    %c0_i32_1 = arith.constant 0 : i32
    return %arg0, %c0_i32, %c0_i32_0 : i32, i32, i32
  }
}

module attributes {stable_mosaic.version = 11 : i64} {
  func.func @_apply_kernel(%arg0: i32, %arg1: memref<512x40xbf16, #tpu.memory_space<vmem>>, %arg2: memref<40x128xbf16, #tpu.memory_space<vmem>>, %arg3: memref<1x128xf32, #tpu.memory_space<vmem>>, %arg4: memref<1x128xf32, #tpu.memory_space<vmem>>, %arg5: memref<512x128xf32, #tpu.memory_space<vmem>>) attributes {dimension_semantics = [#tpu.dimension_semantics<parallel>], iteration_bounds = array<i64: 1>, scalar_prefetch = 0 : i64, scratch_operands = 0 : i64, tpu.core_type = #tpu.core_type<tc>, window_params = [{transform_indices = @transform_0, window_bounds = array<i64: 512, 40>}, {pipeline_mode = #tpu.pipeline_mode<synchronous>, transform_indices = @transform_1, window_bounds = array<i64: 40, 128>}, {pipeline_mode = #tpu.pipeline_mode<synchronous>, transform_indices = @transform_2, window_bounds = array<i64: 1, 128>}, {pipeline_mode = #tpu.pipeline_mode<synchronous>, transform_indices = @transform_3, window_bounds = array<i64: 1, 128>}, {transform_indices = @transform_4, window_bounds = array<i64: 512, 128>}]} {
    %c0 = arith.constant 0 : index
    %c0_0 = arith.constant 0 : index
    %0 = vector.load %arg1[%c0, %c0_0] : memref<512x40xbf16, #tpu.memory_space<vmem>>, vector<512x40xbf16>
    %c0_1 = arith.constant 0 : index
    %c0_2 = arith.constant 0 : index
    %1 = vector.load %arg2[%c0_1, %c0_2] : memref<40x128xbf16, #tpu.memory_space<vmem>>, vector<40x128xbf16>
    %cst = arith.constant dense<0.000000e+00> : vector<512x128xf32>
    %2 = tpu.matmul %0, %1, %cst {dimension_numbers = #tpu.dot_dimension_numbers<[1], [0], [0], [1], [0, 0, 1, 1], [], []>} : vector<512x40xbf16>, vector<40x128xbf16>, vector<512x128xf32> -> vector<512x128xf32>
    %c0_3 = arith.constant 0 : index
    %c0_4 = arith.constant 0 : index
    %3 = vector.load %arg3[%c0_3, %c0_4] : memref<1x128xf32, #tpu.memory_space<vmem>>, vector<1x128xf32>
    %4 = vector.broadcast %3 : vector<1x128xf32> to vector<512x128xf32>
    %5 = arith.mulf %2, %4 : vector<512x128xf32>
    %c0_5 = arith.constant 0 : index
    %c0_6 = arith.constant 0 : index
    %6 = vector.load %arg4[%c0_5, %c0_6] : memref<1x128xf32, #tpu.memory_space<vmem>>, vector<1x128xf32>
    %7 = vector.broadcast %6 : vector<1x128xf32> to vector<512x128xf32>
    %8 = arith.addf %5, %7 : vector<512x128xf32>
    %cst_7 = arith.constant 0.000000e+00 : f32
    %9 = vector.broadcast %cst_7 : f32 to vector<512x128xf32>
    %10 = arith.cmpf ogt, %8, %9 : vector<512x128xf32>
    %cst_8 = arith.constant 1.000000e-01 : f32
    %11 = vector.broadcast %cst_8 : f32 to vector<512x128xf32>
    %12 = arith.mulf %11, %8 : vector<512x128xf32>
    %13 = arith.select %10, %8, %12 : vector<512x128xi1>, vector<512x128xf32>
    %c0_9 = arith.constant 0 : index
    %c0_10 = arith.constant 0 : index
    %14 = vector.load %arg5[%c0_9, %c0_10] : memref<512x128xf32, #tpu.memory_space<vmem>>, vector<512x128xf32>
    tpu.vector_store %arg5[%c0_9, %c0_10], %13 {strides = array<i32>} : memref<512x128xf32, #tpu.memory_space<vmem>>, vector<512x128xf32>,
    return
  }
  func.func @transform_0(%arg0: i32) -> (i32, i32) {
    %c0_i32 = arith.constant 0 : i32
    %c0_i32_0 = arith.constant 0 : i32
    return %arg0, %c0_i32 : i32, i32
  }
  func.func @transform_1(%arg0: i32) -> (i32, i32) {
    %c0_i32 = arith.constant 0 : i32
    %c0_i32_0 = arith.constant 0 : i32
    %c0_i32_1 = arith.constant 0 : i32
    return %c0_i32, %c0_i32_0 : i32, i32
  }
  func.func @transform_2(%arg0: i32) -> (i32, i32) {
    %c0_i32 = arith.constant 0 : i32
    %c0_i32_0 = arith.constant 0 : i32
    %c0_i32_1 = arith.constant 0 : i32
    return %c0_i32, %c0_i32_0 : i32, i32
  }
  func.func @transform_3(%arg0: i32) -> (i32, i32) {
    %c0_i32 = arith.constant 0 : i32
    %c0_i32_0 = arith.constant 0 : i32
    %c0_i32_1 = arith.constant 0 : i32
    return %c0_i32, %c0_i32_0 : i32, i32
  }
  func.func @transform_4(%arg0: i32) -> (i32, i32) {
    %c0_i32 = arith.constant 0 : i32
    %c0_i32_0 = arith.constant 0 : i32
    return %arg0, %c0_i32 : i32, i32
  }
}

</mosaic_0001>

<llo_original>
// kernel: cnn_block.3
$region0: #{cnn_block.3}
  #allocation0 [shape = 'u32[]', space=smem, size = 0x4, offset = 0x4, fixed_abs, tag = 'smem constant byte address 0x4 - core index']
  #allocation1 [shape = 'u32[144,128]{1,0:T(1,128)}', space=vmem, size = 0x12000, scoped, tag = 'internal scratch']
  %s0 = inlined_call_operand.vmem [shape: bf16[512,40], index: 0, kind: input, shape index: {}]
  %s1 = inlined_call_operand.vmem [shape: bf16[40,128], index: 1, kind: input, shape index: {}]
  %s2 = inlined_call_operand.vmem [shape: f32[1,128], index: 2, kind: input, shape index: {}]
  %s3 = inlined_call_operand.vmem [shape: f32[1,128], index: 3, kind: input, shape index: {}]
  %s4 = inlined_call_operand.vmem [shape: f32[512,128], index: 4, kind: output, shape index: {}]
  %s5 = sld [smem:[#allocation0]]
  $region26: #{cnn_block.3} parent=0
    _
  %s7 = ssub.s32 1, %s5
  %s8 = scalar_select 0, %s7, %s5
  // Predicated region
  $region2: #{cnn_block.3} parent=0 // pred_check
    _
  $region3: #{cnn_block.3} parent=0 // pred_check_branch
    %10 = sbr.rel (0) target = $region5
  $region4: #{cnn_block.3} parent=0 // pred_region
    _
  $region5: #{cnn_block.3} parent=0 // pred_fallthru
    _
  // Predicated region
  $region6: #{cnn_block.3} parent=0 // pred_check
    _
  $region7: #{cnn_block.3} parent=0 // pred_check_branch
    %12 = sbr.rel (0) target = $region9
  $region8: #{cnn_block.3} parent=0 // pred_region
    _
  $region9: #{cnn_block.3} parent=0 // pred_fallthru
    _
  // Predicated region
  $region10: #{cnn_block.3} parent=0 // pred_check
    _
  $region11: #{cnn_block.3} parent=0 // pred_check_branch
    %14 = sbr.rel (0) target = $region13
  $region12: #{cnn_block.3} parent=0 // pred_region
    _
  $region13: #{cnn_block.3} parent=0 // pred_fallthru
    _
  // Predicated region
  $region14: #{cnn_block.3} parent=0 // pred_check
    _
  $region15: #{cnn_block.3} parent=0 // pred_check_branch
    %16 = sbr.rel (0) target = $region17
  $region16: #{cnn_block.3} parent=0 // pred_region
    _
  $region17: #{cnn_block.3} parent=0 // pred_fallthru
    _
  %v18 = vld [vmem:[%s0] sm:$0xf]
  %v19 = vld [vmem:[%s0 + $0x4] sm:$0xf]
  %v20 = vld [vmem:[%s0 + $0x8] sm:$0xf]
  %v21 = vld [vmem:[%s0 + $0xc] sm:$0xf]
  %v22 = vld [vmem:[%s0 + $0x10] sm:$0xf]
  %v23 = vld [vmem:[%s0 + $0x14] sm:$0xf]
  %v24 = vld [vmem:[%s0 + $0x18] sm:$0xf]
  %v25 = vld [vmem:[%s0 + $0x1c] sm:$0xf]
  %v26 = vld [vmem:[%s0 + $0x20] sm:$0xf]
  %v27 = vld [vmem:[%s0 + $0x24] sm:$0xf]
  %v28 = vld [vmem:[%s0 + $0x28] sm:$0xf]
  %v29 = vld [vmem:[%s0 + $0x2c] sm:$0xf]
  %v30 = vld [vmem:[%s0 + $0x30] sm:$0xf]
  %v31 = vld [vmem:[%s0 + $0x34] sm:$0xf]
  %v32 = vld [vmem:[%s0 + $0x38] sm:$0xf]
  %v33 = vld [vmem:[%s0 + $0x3c] sm:$0xf]
  %v34 = vld [vmem:[%s0 + $0x40] sm:$0xf]
  %v35 = vld [vmem:[%s0 + $0x44] sm:$0xf]
  %v36 = vld [vmem:[%s0 + $0x48] sm:$0xf]
  %v37 = vld [vmem:[%s0 + $0x4c] sm:$0xf]
  %v38 = vld [vmem:[%s0 + $0x50] sm:$0xf]
  %v39 = vld [vmem:[%s0 + $0x54] sm:$0xf]
  %v40 = vld [vmem:[%s0 + $0x58] sm:$0xf]
  %v41 = vld [vmem:[%s0 + $0x5c] sm:$0xf]
  %v42 = vld [vmem:[%s0 + $0x60] sm:$0xf]
  %v43 = vld [vmem:[%s0 + $0x64] sm:$0xf]
  %v44 = vld [vmem:[%s0 + $0x68] sm:$0xf]
  %v45 = vld [vmem:[%s0 + $0x6c] sm:$0xf]
  %v46 = vld [vmem:[%s0 + $0x70] sm:$0xf]
  %v47 = vld [vmem:[%s0 + $0x74] sm:$0xf]
  %v48 = vld [vmem:[%s0 + $0x78] sm:$0xf]
  %v49 = vld [vmem:[%s0 + $0x7c] sm:$0xf]
  %v50 = vld [vmem:[%s0 + $0x80] sm:$0xf]
  %v51 = vld [vmem:[%s0 + $0x84] sm:$0xf]
  %v52 = vld [vmem:[%s0 + $0x88] sm:$0xf]
  %v53 = vld [vmem:[%s0 + $0x8c] sm:$0xf]
  %v54 = vld [vmem:[%s0 + $0x90] sm:$0xf]
  %v55 = vld [vmem:[%s0 + $0x94] sm:$0xf]
  %v56 = vld [vmem:[%s0 + $0x98] sm:$0xf]
  %v57 = vld [vmem:[%s0 + $0x9c] sm:$0xf]
  %v58 = vld [vmem:[%s0 + $0xa0] sm:$0xf]
  %v59 = vld [vmem:[%s0 + $0xa4] sm:$0xf]
  %v60 = vld [vmem:[%s0 + $0xa8] sm:$0xf]
  %v61 = vld [vmem:[%s0 + $0xac] sm:$0xf]
  %v62 = vld [vmem:[%s0 + $0xb0] sm:$0xf]
  %v63 = vld [vmem:[%s0 + $0xb4] sm:$0xf]
  %v64 = vld [vmem:[%s0 + $0xb8] sm:$0xf]
  %v65 = vld [vmem:[%s0 + $0xbc] sm:$0xf]
  %v66 = vld [vmem:[%s0 + $0xc0] sm:$0xf]
  %v67 = vld [vmem:[%s0 + $0xc4] sm:$0xf]
  %v68 = vld [vmem:[%s0 + $0xc8] sm:$0xf]
  %v69 = vld [vmem:[%s0 + $0xcc] sm:$0xf]
  %v70 = vld [vmem:[%s0 + $0xd0] sm:$0xf]
  %v71 = vld [vmem:[%s0 + $0xd4] sm:$0xf]
  %v72 = vld [vmem:[%s0 + $0xd8] sm:$0xf]
  %v73 = vld [vmem:[%s0 + $0xdc] sm:$0xf]
  %v74 = vld [vmem:[%s0 + $0xe0] sm:$0xf]
  %v75 = vld [vmem:[%s0 + $0xe4] sm:$0xf]
  %v76 = vld [vmem:[%s0 + $0xe8] sm:$0xf]
  %v77 = vld [vmem:[%s0 + $0xec] sm:$0xf]
  %v78 = vld [vmem:[%s0 + $0xf0] sm:$0xf]
  %v79 = vld [vmem:[%s0 + $0xf4] sm:$0xf]
  %v80 = vld [vmem:[%s0 + $0xf8] sm:$0xf]
  %v81 = vld [vmem:[%s0 + $0xfc] sm:$0xf]
  %v82 = vld [vmem:[%s1] sm:$0xf]
  %v83 = vld [vmem:[%s1 + $0x4] sm:$0xf]
  %v84 = vld [vmem:[%s1 + $0x8] sm:$0xf]
  %v85 = vld [vmem:[%s1 + $0xc] sm:$0xf]
  %v86 = vld [vmem:[%s1 + $0x10] sm:$0xf]
  %v151 = vunpack.c.l.b16 %v18
  %v152 = vunpack.c.l.b16 %v19
  %v153 = vunpack.c.l.b16 %v20
  %v154 = vunpack.c.l.b16 %v21
  %v155 = vunpack.c.l.b16 %v22
  %v156 = vunpack.c.l.b16 %v23
  %v157 = vunpack.c.l.b16 %v24
  %v158 = vunpack.c.l.b16 %v25
  %v159 = vunpack.c.l.b16 %v26
  %v160 = vunpack.c.l.b16 %v27
  %v161 = vunpack.c.l.b16 %v28
  %v162 = vunpack.c.l.b16 %v29
  %v163 = vunpack.c.l.b16 %v30
  %v164 = vunpack.c.l.b16 %v31
  %v165 = vunpack.c.l.b16 %v32
  %v166 = vunpack.c.l.b16 %v33
  %v167 = vunpack.c.l.b16 %v34
  %v168 = vunpack.c.l.b16 %v35
  %v169 = vunpack.c.l.b16 %v36
  %v170 = vunpack.c.l.b16 %v37
  %v171 = vunpack.c.l.b16 %v38
  %v172 = vunpack.c.l.b16 %v39
  %v173 = vunpack.c.l.b16 %v40
  %v174 = vunpack.c.l.b16 %v41
  %v175 = vunpack.c.l.b16 %v42
  %v176 = vunpack.c.l.b16 %v43
  %v177 = vunpack.c.l.b16 %v44
  %v178 = vunpack.c.l.b16 %v45
  %v179 = vunpack.c.l.b16 %v46
  %v180 = vunpack.c.l.b16 %v47
  %v181 = vunpack.c.l.b16 %v48
  %v182 = vunpack.c.l.b16 %v49
  %v183 = vunpack.c.l.b16 %v50
  %v184 = vunpack.c.l.b16 %v51
  %v185 = vunpack.c.l.b16 %v52
  %v186 = vunpack.c.l.b16 %v53
  %v187 = vunpack.c.l.b16 %v54
  %v188 = vunpack.c.l.b16 %v55
  %v189 = vunpack.c.l.b16 %v56
  %v190 = vunpack.c.l.b16 %v57
  %v191 = vunpack.c.l.b16 %v58
  %v192 = vunpack.c.l.b16 %v59
  %v193 = vunpack.c.l.b16 %v60
  %v194 = vunpack.c.l.b16 %v61
  %v195 = vunpack.c.l.b16 %v62
  %v196 = vunpack.c.l.b16 %v63
  %v197 = vunpack.c.l.b16 %v64
  %v198 = vunpack.c.l.b16 %v65
  %v199 = vunpack.c.l.b16 %v66
  %v200 = vunpack.c.l.b16 %v67
  %v201 = vunpack.c.l.b16 %v68
  %v202 = vunpack.c.l.b16 %v69
  %v203 = vunpack.c.l.b16 %v70
  %v204 = vunpack.c.l.b16 %v71
  %v205 = vunpack.c.l.b16 %v72
  %v206 = vunpack.c.l.b16 %v73
  %v207 = vunpack.c.l.b16 %v74
  %v208 = vunpack.c.l.b16 %v75
  %v209 = vunpack.c.l.b16 %v76
  %v210 = vunpack.c.l.b16 %v77
  %v211 = vunpack.c.l.b16 %v78
  %v212 = vunpack.c.l.b16 %v79
  %v213 = vunpack.c.l.b16 %v80
  %v214 = vunpack.c.l.b16 %v81
  %v215 = vpack.c.b16 %v152, %v151
  %v216 = vpack.c.b16 %v154, %v153
  %v217 = vpack.c.b16 %v156, %v155
  %v218 = vpack.c.b16 %v158, %v157
  %v219 = vpack.c.b16 %v160, %v159
  %v220 = vpack.c.b16 %v162, %v161
  %v221 = vpack.c.b16 %v164, %v163
  %v222 = vpack.c.b16 %v166, %v165
  %v223 = vpack.c.b16 %v168, %v167
  %v224 = vpack.c.b16 %v170, %v169
  %v225 = vpack.c.b16 %v172, %v171
  %v226 = vpack.c.b16 %v174, %v173
  %v227 = vpack.c.b16 %v176, %v175
  %v228 = vpack.c.b16 %v178, %v177
  %v229 = vpack.c.b16 %v180, %v179
  %v230 = vpack.c.b16 %v182, %v181
  %v231 = vpack.c.b16 %v184, %v183
  %v232 = vpack.c.b16 %v186, %v185
  %v233 = vpack.c.b16 %v188, %v187
  %v234 = vpack.c.b16 %v190, %v189
  %v235 = vpack.c.b16 %v192, %v191
  %v236 = vpack.c.b16 %v194, %v193
  %v237 = vpack.c.b16 %v196, %v195
  %v238 = vpack.c.b16 %v198, %v197
  %v239 = vpack.c.b16 %v200, %v199
  %v240 = vpack.c.b16 %v202, %v201
  %v241 = vpack.c.b16 %v204, %v203
  %v242 = vpack.c.b16 %v206, %v205
  %v243 = vpack.c.b16 %v208, %v207
  %v244 = vpack.c.b16 %v210, %v209
  %v245 = vpack.c.b16 %v212, %v211
  %v246 = vpack.c.b16 %v214, %v213
  %v252 = vunpack.c.l.b16 %v82
  %v253 = vunpack.c.l.b16 %v83
  %v254 = vunpack.c.l.b16 %v84
  %v255 = vunpack.c.l.b16 %v85
  %v256 = vunpack.c.l.b16 %v86
  %v257 = vpack.c.b16 %v253, %v252
  %v258 = vpack.c.b16 %v255, %v254
  %v259 = vpack.c.b16 %v256, %v256
  %vm262 = vcmask 326656
  %v264 = vsel %vm262, %v215, 0
  %v267 = vsel %vm262, %v216, 0
  %v270 = vsel %vm262, %v217, 0
  %v273 = vsel %vm262, %v218, 0
  %v276 = vsel %vm262, %v219, 0
  %v279 = vsel %vm262, %v220, 0
  %v282 = vsel %vm262, %v221, 0
  %v285 = vsel %vm262, %v222, 0
  %v288 = vsel %vm262, %v223, 0
  %v291 = vsel %vm262, %v224, 0
  %v294 = vsel %vm262, %v225, 0
  %v297 = vsel %vm262, %v226, 0
  %v300 = vsel %vm262, %v227, 0
  %v303 = vsel %vm262, %v228, 0
  %v306 = vsel %vm262, %v229, 0
  %v309 = vsel %vm262, %v230, 0
  %v312 = vsel %vm262, %v231, 0
  %v315 = vsel %vm262, %v232, 0
  %v318 = vsel %vm262, %v233, 0
  %v321 = vsel %vm262, %v234, 0
  %v324 = vsel %vm262, %v235, 0
  %v327 = vsel %vm262, %v236, 0
  %v330 = vsel %vm262, %v237, 0
  %v333 = vsel %vm262, %v238, 0
  %v336 = vsel %vm262, %v239, 0
  %v339 = vsel %vm262, %v240, 0
  %v342 = vsel %vm262, %v241, 0
  %v345 = vsel %vm262, %v242, 0
  %v348 = vsel %vm262, %v243, 0
  %v351 = vsel %vm262, %v244, 0
  %v354 = vsel %vm262, %v245, 0
  %v357 = vsel %vm262, %v246, 0
  %vm359 = vcmask 1043456
  %v361 = vsel %vm359, %v259, 0
  %363 = vmatprep.subr.bf16.mxu0 0
  %364 = vmatpush1.bf16.msra.mxu0 %v257
  %365 = vmatprep.subr.bf16.mxu0 0
  %366 = vmatpush1.bf16.msra.mxu0 %v258
  %367 = vmatprep.subr.bf16.mxu0 0
  %368 = vmatpush1.bf16.msra.mxu0 %v361
  %369 = vmatprep.subr.bf16.mxu0 0
  %370 = vmatpush1.bf16.msra.mxu0 0
  %371 = vmatprep.subr.bf16.mxu0 0
  %372 = vmatpush1.bf16.msra.mxu0 0
  %373 = vmatprep.subr.bf16.mxu0 0
  %374 = vmatpush1.bf16.msra.mxu0 0
  %375 = vmatprep.subr.bf16.mxu0 0
  %376 = vmatpush1.bf16.msra.mxu0 0
  %377 = vmatprep.subr.bf16.mxu0 0
  %378 = vmatpush1.bf16.msra.mxu0 0
  %379 = vmatprep.subr.bf16.mxu0 0
  %380 = vmatpush1.bf16.msra.mxu0 0
  %381 = vmatprep.subr.bf16.mxu0 0
  %382 = vmatpush1.bf16.msra.mxu0 0
  %383 = vmatprep.subr.bf16.mxu0 0
  %384 = vmatpush1.bf16.msra.mxu0 0
  %385 = vmatprep.subr.bf16.mxu0 0
  %386 = vmatpush1.bf16.msra.mxu0 0
  %387 = vmatprep.subr.bf16.mxu0 0
  %388 = vmatpush1.bf16.msra.mxu0 0
  %389 = vmatprep.subr.bf16.mxu0 0
  %390 = vmatpush1.bf16.msra.mxu0 0
  %391 = vmatprep.subr.bf16.mxu0 0
  %392 = vmatpush1.bf16.msra.mxu0 0
  %393 = vmatprep.subr.bf16.mxu0 0
  %394 = vmatpush1.bf16.msra.mxu0 0
  %395 = vmatprep.mubr.bf16.mxu0 0
  %396 = vmatmul.mubr.bf16.gmra.mrb[0].mxu0 %v264
  %v397 = vpop.f32.mrb[0].mxu0
  %v398 = vadd.f32 0.0, %v397
  %v399 = vpop.f32.mrb[0].mxu0
  %v400 = vpop.f32.mrb[0].mxu0
  %v401 = vadd.f32 0.0, %v400
  %v402 = vpop.f32.mrb[0].mxu0
  %403 = vmatprep.mubr.bf16.mxu0 0
  %404 = vmatmul.mubr.bf16.gmra.mrb[0].mxu0 %v267
  %v405 = vpop.f32.mrb[0].mxu0
  %v406 = vadd.f32 0.0, %v405
  %v407 = vpop.f32.mrb[0].mxu0
  %v408 = vpop.f32.mrb[0].mxu0
  %v409 = vadd.f32 0.0, %v408
  %v410 = vpop.f32.mrb[0].mxu0
  %411 = vmatprep.mubr.bf16.mxu0 0
  %412 = vmatmul.mubr.bf16.gmra.mrb[0].mxu0 %v270
  %v413 = vpop.f32.mrb[0].mxu0
  %v414 = vadd.f32 0.0, %v413
  %v415 = vpop.f32.mrb[0].mxu0
  %v416 = vpop.f32.mrb[0].mxu0
  %v417 = vadd.f32 0.0, %v416
  %v418 = vpop.f32.mrb[0].mxu0
  %419 = vmatprep.mubr.bf16.mxu0 0
  %420 = vmatmul.mubr.bf16.gmra.mrb[0].mxu0 %v273
  %v421 = vpop.f32.mrb[0].mxu0
  %v422 = vadd.f32 0.0, %v421
  %v423 = vpop.f32.mrb[0].mxu0
  %v424 = vpop.f32.mrb[0].mxu0
  %v425 = vadd.f32 0.0, %v424
  %v426 = vpop.f32.mrb[0].mxu0
  %427 = vmatprep.mubr.bf16.mxu0 0
  %428 = vmatmul.mubr.bf16.gmra.mrb[0].mxu0 %v276
  %v429 = vpop.f32.mrb[0].mxu0
  %v430 = vadd.f32 0.0, %v429
  %v431 = vpop.f32.mrb[0].mxu0
  %v432 = vpop.f32.mrb[0].mxu0
  %v433 = vadd.f32 0.0, %v432
  %v434 = vpop.f32.mrb[0].mxu0
  %435 = vmatprep.mubr.bf16.mxu0 0
  %436 = vmatmul.mubr.bf16.gmra.mrb[0].mxu0 %v279
  %v437 = vpop.f32.mrb[0].mxu0
  %v438 = vadd.f32 0.0, %v437
  %v439 = vpop.f32.mrb[0].mxu0
  %v440 = vpop.f32.mrb[0].mxu0
  %v441 = vadd.f32 0.0, %v440
  %v442 = vpop.f32.mrb[0].mxu0
  %443 = vmatprep.mubr.bf16.mxu0 0
  %444 = vmatmul.mubr.bf16.gmra.mrb[0].mxu0 %v282
  %v445 = vpop.f32.mrb[0].mxu0
  %v446 = vadd.f32 0.0, %v445
  %v447 = vpop.f32.mrb[0].mxu0
  %v448 = vpop.f32.mrb[0].mxu0
  %v449 = vadd.f32 0.0, %v448
  %v450 = vpop.f32.mrb[0].mxu0
  %451 = vmatprep.mubr.bf16.mxu0 0
  %452 = vmatmul.mubr.bf16.gmra.mrb[0].mxu0 %v285
  %v453 = vpop.f32.mrb[0].mxu0
  %v454 = vadd.f32 0.0, %v453
  %v455 = vpop.f32.mrb[0].mxu0
  %v456 = vpop.f32.mrb[0].mxu0
  %v457 = vadd.f32 0.0, %v456
  %v458 = vpop.f32.mrb[0].mxu0
  %459 = vmatprep.mubr.bf16.mxu0 0
  %460 = vmatmul.mubr.bf16.gmra.mrb[0].mxu0 %v288
  %v461 = vpop.f32.mrb[0].mxu0
  %v462 = vadd.f32 0.0, %v461
  %v463 = vpop.f32.mrb[0].mxu0
  %v464 = vpop.f32.mrb[0].mxu0
  %v465 = vadd.f32 0.0, %v464
  %v466 = vpop.f32.mrb[0].mxu0
  %467 = vmatprep.mubr.bf16.mxu0 0
  %468 = vmatmul.mubr.bf16.gmra.mrb[0].mxu0 %v291
  %v469 = vpop.f32.mrb[0].mxu0
  %v470 = vadd.f32 0.0, %v469
  %v471 = vpop.f32.mrb[0].mxu0
  %v472 = vpop.f32.mrb[0].mxu0
  %v473 = vadd.f32 0.0, %v472
  %v474 = vpop.f32.mrb[0].mxu0
  %475 = vmatprep.mubr.bf16.mxu0 0
  %476 = vmatmul.mubr.bf16.gmra.mrb[0].mxu0 %v294
  %v477 = vpop.f32.mrb[0].mxu0
  %v478 = vadd.f32 0.0, %v477
  %v479 = vpop.f32.mrb[0].mxu0
  %v480 = vpop.f32.mrb[0].mxu0
  %v481 = vadd.f32 0.0, %v480
  %v482 = vpop.f32.mrb[0].mxu0
  %483 = vmatprep.mubr.bf16.mxu0 0
  %484 = vmatmul.mubr.bf16.gmra.mrb[0].mxu0 %v297
  %v485 = vpop.f32.mrb[0].mxu0
  %v486 = vadd.f32 0.0, %v485
  %v487 = vpop.f32.mrb[0].mxu0
  %v488 = vpop.f32.mrb[0].mxu0
  %v489 = vadd.f32 0.0, %v488
  %v490 = vpop.f32.mrb[0].mxu0
  %491 = vmatprep.mubr.bf16.mxu0 0
  %492 = vmatmul.mubr.bf16.gmra.mrb[0].mxu0 %v300
  %v493 = vpop.f32.mrb[0].mxu0
  %v494 = vadd.f32 0.0, %v493
  %v495 = vpop.f32.mrb[0].mxu0
  %v496 = vpop.f32.mrb[0].mxu0
  %v497 = vadd.f32 0.0, %v496
  %v498 = vpop.f32.mrb[0].mxu0
  %499 = vmatprep.mubr.bf16.mxu0 0
  %500 = vmatmul.mubr.bf16.gmra.mrb[0].mxu0 %v303
  %v501 = vpop.f32.mrb[0].mxu0
  %v502 = vadd.f32 0.0, %v501
  %v503 = vpop.f32.mrb[0].mxu0
  %v504 = vpop.f32.mrb[0].mxu0
  %v505 = vadd.f32 0.0, %v504
  %v506 = vpop.f32.mrb[0].mxu0
  %507 = vmatprep.mubr.bf16.mxu0 0
  %508 = vmatmul.mubr.bf16.gmra.mrb[0].mxu0 %v306
  %v509 = vpop.f32.mrb[0].mxu0
  %v510 = vadd.f32 0.0, %v509
  %v511 = vpop.f32.mrb[0].mxu0
  %v512 = vpop.f32.mrb[0].mxu0
  %v513 = vadd.f32 0.0, %v512
  %v514 = vpop.f32.mrb[0].mxu0
  %515 = vmatprep.mubr.bf16.mxu0 0
  %516 = vmatmul.mubr.bf16.gmra.mrb[0].mxu0 %v309
  %v517 = vpop.f32.mrb[0].mxu0
  %v518 = vadd.f32 0.0, %v517
  %v519 = vpop.f32.mrb[0].mxu0
  %v520 = vpop.f32.mrb[0].mxu0
  %v521 = vadd.f32 0.0, %v520
  %v522 = vpop.f32.mrb[0].mxu0
  %523 = vmatprep.mubr.bf16.mxu0 0
  %524 = vmatmul.mubr.bf16.gmra.mrb[0].mxu0 %v312
  %v525 = vpop.f32.mrb[0].mxu0
  %v526 = vadd.f32 0.0, %v525
  %v527 = vpop.f32.mrb[0].mxu0
  %v528 = vpop.f32.mrb[0].mxu0
  %v529 = vadd.f32 0.0, %v528
  %v530 = vpop.f32.mrb[0].mxu0
  %531 = vmatprep.mubr.bf16.mxu0 0
  %532 = vmatmul.mubr.bf16.gmra.mrb[0].mxu0 %v315
  %v533 = vpop.f32.mrb[0].mxu0
  %v534 = vadd.f32 0.0, %v533
  %v535 = vpop.f32.mrb[0].mxu0
  %v536 = vpop.f32.mrb[0].mxu0
  %v537 = vadd.f32 0.0, %v536
  %v538 = vpop.f32.mrb[0].mxu0
  %539 = vmatprep.mubr.bf16.mxu0 0
  %540 = vmatmul.mubr.bf16.gmra.mrb[0].mxu0 %v318
  %v541 = vpop.f32.mrb[0].mxu0
  %v542 = vadd.f32 0.0, %v541
  %v543 = vpop.f32.mrb[0].mxu0
  %v544 = vpop.f32.mrb[0].mxu0
  %v545 = vadd.f32 0.0, %v544
  %v546 = vpop.f32.mrb[0].mxu0
  %547 = vmatprep.mubr.bf16.mxu0 0
  %548 = vmatmul.mubr.bf16.gmra.mrb[0].mxu0 %v321
  %v549 = vpop.f32.mrb[0].mxu0
  %v550 = vadd.f32 0.0, %v549
  %v551 = vpop.f32.mrb[0].mxu0
  %v552 = vpop.f32.mrb[0].mxu0
  %v553 = vadd.f32 0.0, %v552
  %v554 = vpop.f32.mrb[0].mxu0
  %555 = vmatprep.mubr.bf16.mxu0 0
  %556 = vmatmul.mubr.bf16.gmra.mrb[0].mxu0 %v324
  %v557 = vpop.f32.mrb[0].mxu0
  %v558 = vadd.f32 0.0, %v557
  %v559 = vpop.f32.mrb[0].mxu0
  %v560 = vpop.f32.mrb[0].mxu0
  %v561 = vadd.f32 0.0, %v560
  %v562 = vpop.f32.mrb[0].mxu0
  %563 = vmatprep.mubr.bf16.mxu0 0
  %564 = vmatmul.mubr.bf16.gmra.mrb[0].mxu0 %v327
  %v565 = vpop.f32.mrb[0].mxu0
  %v566 = vadd.f32 0.0, %v565
  %v567 = vpop.f32.mrb[0].mxu0
  %v568 = vpop.f32.mrb[0].mxu0
  %v569 = vadd.f32 0.0, %v568
  %v570 = vpop.f32.mrb[0].mxu0
  %571 = vmatprep.mubr.bf16.mxu0 0
  %572 = vmatmul.mubr.bf16.gmra.mrb[0].mxu0 %v330
  %v573 = vpop.f32.mrb[0].mxu0
  %v574 = vadd.f32 0.0, %v573
  %v575 = vpop.f32.mrb[0].mxu0
  %v576 = vpop.f32.mrb[0].mxu0
  %v577 = vadd.f32 0.0, %v576
  %v578 = vpop.f32.mrb[0].mxu0
  %579 = vmatprep.mubr.bf16.mxu0 0
  %580 = vmatmul.mubr.bf16.gmra.mrb[0].mxu0 %v333
  %v581 = vpop.f32.mrb[0].mxu0
  %v582 = vadd.f32 0.0, %v581
  %v583 = vpop.f32.mrb[0].mxu0
  %v584 = vpop.f32.mrb[0].mxu0
  %v585 = vadd.f32 0.0, %v584
  %v586 = vpop.f32.mrb[0].mxu0
  %587 = vmatprep.mubr.bf16.mxu0 0
  %588 = vmatmul.mubr.bf16.gmra.mrb[0].mxu0 %v336
  %v589 = vpop.f32.mrb[0].mxu0
  %v590 = vadd.f32 0.0, %v589
  %v591 = vpop.f32.mrb[0].mxu0
  %v592 = vpop.f32.mrb[0].mxu0
  %v593 = vadd.f32 0.0, %v592
  %v594 = vpop.f32.mrb[0].mxu0
  %595 = vmatprep.mubr.bf16.mxu0 0
  %596 = vmatmul.mubr.bf16.gmra.mrb[0].mxu0 %v339
  %v597 = vpop.f32.mrb[0].mxu0
  %v598 = vadd.f32 0.0, %v597
  %v599 = vpop.f32.mrb[0].mxu0
  %v600 = vpop.f32.mrb[0].mxu0
  %v601 = vadd.f32 0.0, %v600
  %v602 = vpop.f32.mrb[0].mxu0
  %603 = vmatprep.mubr.bf16.mxu0 0
  %604 = vmatmul.mubr.bf16.gmra.mrb[0].mxu0 %v342
  %v605 = vpop.f32.mrb[0].mxu0
  %v606 = vadd.f32 0.0, %v605
  %v607 = vpop.f32.mrb[0].mxu0
  %v608 = vpop.f32.mrb[0].mxu0
  %v609 = vadd.f32 0.0, %v608
  %v610 = vpop.f32.mrb[0].mxu0
  %611 = vmatprep.mubr.bf16.mxu0 0
  %612 = vmatmul.mubr.bf16.gmra.mrb[0].mxu0 %v345
  %v613 = vpop.f32.mrb[0].mxu0
  %v614 = vadd.f32 0.0, %v613
  %v615 = vpop.f32.mrb[0].mxu0
  %v616 = vpop.f32.mrb[0].mxu0
  %v617 = vadd.f32 0.0, %v616
  %v618 = vpop.f32.mrb[0].mxu0
  %619 = vmatprep.mubr.bf16.mxu0 0
  %620 = vmatmul.mubr.bf16.gmra.mrb[0].mxu0 %v348
  %v621 = vpop.f32.mrb[0].mxu0
  %v622 = vadd.f32 0.0, %v621
  %v623 = vpop.f32.mrb[0].mxu0
  %v624 = vpop.f32.mrb[0].mxu0
  %v625 = vadd.f32 0.0, %v624
  %v626 = vpop.f32.mrb[0].mxu0
  %627 = vmatprep.mubr.bf16.mxu0 0
  %628 = vmatmul.mubr.bf16.gmra.mrb[0].mxu0 %v351
  %v629 = vpop.f32.mrb[0].mxu0
  %v630 = vadd.f32 0.0, %v629
  %v631 = vpop.f32.mrb[0].mxu0
  %v632 = vpop.f32.mrb[0].mxu0
  %v633 = vadd.f32 0.0, %v632
  %v634 = vpop.f32.mrb[0].mxu0
  %635 = vmatprep.mubr.bf16.mxu0 0
  %636 = vmatmul.mubr.bf16.gmra.mrb[0].mxu0 %v354
  %v637 = vpop.f32.mrb[0].mxu0
  %v638 = vadd.f32 0.0, %v637
  %v639 = vpop.f32.mrb[0].mxu0
  %v640 = vpop.f32.mrb[0].mxu0
  %v641 = vadd.f32 0.0, %v640
  %v642 = vpop.f32.mrb[0].mxu0
  %643 = vmatprep.mubr.bf16.mxu0 0
  %644 = vmatmul.mubr.bf16.gmra.mrb[0].mxu0 %v357
  %v645 = vpop.f32.mrb[0].mxu0
  %v646 = vadd.f32 0.0, %v645
  %v647 = vpop.f32.mrb[0].mxu0
  %v648 = vpop.f32.mrb[0].mxu0
  %v649 = vadd.f32 0.0, %v648
  %v650 = vpop.f32.mrb[0].mxu0
  %651 = vdwg.mxu0
  %v652 = vld [vmem:[%s2] sm:$0x1]
  %v654 = vlaneseq
  %v655 = vshrl.u32 %v654, 7
  %v656 = vsub.s32 0, %v655
  %v657 = vrot.slane %v652, %v656
  %v659 = vmul.f32 %v398, %v657
  %v660 = vmul.f32 %v401, %v657
  %v661 = vmul.f32 %v406, %v657
  %v662 = vmul.f32 %v409, %v657
  %v663 = vmul.f32 %v414, %v657
  %v664 = vmul.f32 %v417, %v657
  %v665 = vmul.f32 %v422, %v657
  %v666 = vmul.f32 %v425, %v657
  %v667 = vmul.f32 %v430, %v657
  %v668 = vmul.f32 %v433, %v657
  %v669 = vmul.f32 %v438, %v657
  %v670 = vmul.f32 %v441, %v657
  %v671 = vmul.f32 %v446, %v657
  %v672 = vmul.f32 %v449, %v657
  %v673 = vmul.f32 %v454, %v657
  %v674 = vmul.f32 %v457, %v657
  %v675 = vmul.f32 %v462, %v657
  %v676 = vmul.f32 %v465, %v657
  %v677 = vmul.f32 %v470, %v657
  %v678 = vmul.f32 %v473, %v657
  %v679 = vmul.f32 %v478, %v657
  %v680 = vmul.f32 %v481, %v657
  %v681 = vmul.f32 %v486, %v657
  %v682 = vmul.f32 %v489, %v657
  %v683 = vmul.f32 %v494, %v657
  %v684 = vmul.f32 %v497, %v657
  %v685 = vmul.f32 %v502, %v657
  %v686 = vmul.f32 %v505, %v657
  %v687 = vmul.f32 %v510, %v657
  %v688 = vmul.f32 %v513, %v657
  %v689 = vmul.f32 %v518, %v657
  %v690 = vmul.f32 %v521, %v657
  %v691 = vmul.f32 %v526, %v657
  %v692 = vmul.f32 %v529, %v657
  %v693 = vmul.f32 %v534, %v657
  %v694 = vmul.f32 %v537, %v657
  %v695 = vmul.f32 %v542, %v657
  %v696 = vmul.f32 %v545, %v657
  %v697 = vmul.f32 %v550, %v657
  %v698 = vmul.f32 %v553, %v657
  %v699 = vmul.f32 %v558, %v657
  %v700 = vmul.f32 %v561, %v657
  %v701 = vmul.f32 %v566, %v657
  %v702 = vmul.f32 %v569, %v657
  %v703 = vmul.f32 %v574, %v657
  %v704 = vmul.f32 %v577, %v657
  %v705 = vmul.f32 %v582, %v657
  %v706 = vmul.f32 %v585, %v657
  %v707 = vmul.f32 %v590, %v657
  %v708 = vmul.f32 %v593, %v657
  %v709 = vmul.f32 %v598, %v657
  %v710 = vmul.f32 %v601, %v657
  %v711 = vmul.f32 %v606, %v657
  %v712 = vmul.f32 %v609, %v657
  %v713 = vmul.f32 %v614, %v657
  %v714 = vmul.f32 %v617, %v657
  %v715 = vmul.f32 %v622, %v657
  %v716 = vmul.f32 %v625, %v657
  %v717 = vmul.f32 %v630, %v657
  %v718 = vmul.f32 %v633, %v657
  %v719 = vmul.f32 %v638, %v657
  %v720 = vmul.f32 %v641, %v657
  %v721 = vmul.f32 %v646, %v657
  %v722 = vmul.f32 %v649, %v657
  %v723 = vld [vmem:[%s3] sm:$0x1]
  %v725 = vlaneseq
  %v726 = vshrl.u32 %v725, 7
  %v727 = vsub.s32 0, %v726
  %v728 = vrot.slane %v723, %v727
  %v730 = vadd.f32 %v659, %v728
  %v731 = vadd.f32 %v660, %v728
  %v732 = vadd.f32 %v661, %v728
  %v733 = vadd.f32 %v662, %v728
  %v734 = vadd.f32 %v663, %v728
  %v735 = vadd.f32 %v664, %v728
  %v736 = vadd.f32 %v665, %v728
  %v737 = vadd.f32 %v666, %v728
  %v738 = vadd.f32 %v667, %v728
  %v739 = vadd.f32 %v668, %v728
  %v740 = vadd.f32 %v669, %v728
  %v741 = vadd.f32 %v670, %v728
  %v742 = vadd.f32 %v671, %v728
  %v743 = vadd.f32 %v672, %v728
  %v744 = vadd.f32 %v673, %v728
  %v745 = vadd.f32 %v674, %v728
  %v746 = vadd.f32 %v675, %v728
  %v747 = vadd.f32 %v676, %v728
  %v748 = vadd.f32 %v677, %v728
  %v749 = vadd.f32 %v678, %v728
  %v750 = vadd.f32 %v679, %v728
  %v751 = vadd.f32 %v680, %v728
  %v752 = vadd.f32 %v681, %v728
  %v753 = vadd.f32 %v682, %v728
  %v754 = vadd.f32 %v683, %v728
  %v755 = vadd.f32 %v684, %v728
  %v756 = vadd.f32 %v685, %v728
  %v757 = vadd.f32 %v686, %v728
  %v758 = vadd.f32 %v687, %v728
  %v759 = vadd.f32 %v688, %v728
  %v760 = vadd.f32 %v689, %v728
  %v761 = vadd.f32 %v690, %v728
  %v762 = vadd.f32 %v691, %v728
  %v763 = vadd.f32 %v692, %v728
  %v764 = vadd.f32 %v693, %v728
  %v765 = vadd.f32 %v694, %v728
  %v766 = vadd.f32 %v695, %v728
  %v767 = vadd.f32 %v696, %v728
  %v768 = vadd.f32 %v697, %v728
  %v769 = vadd.f32 %v698, %v728
  %v770 = vadd.f32 %v699, %v728
  %v771 = vadd.f32 %v700, %v728
  %v772 = vadd.f32 %v701, %v728
  %v773 = vadd.f32 %v702, %v728
  %v774 = vadd.f32 %v703, %v728
  %v775 = vadd.f32 %v704, %v728
  %v776 = vadd.f32 %v705, %v728
  %v777 = vadd.f32 %v706, %v728
  %v778 = vadd.f32 %v707, %v728
  %v779 = vadd.f32 %v708, %v728
  %v780 = vadd.f32 %v709, %v728
  %v781 = vadd.f32 %v710, %v728
  %v782 = vadd.f32 %v711, %v728
  %v783 = vadd.f32 %v712, %v728
  %v784 = vadd.f32 %v713, %v728
  %v785 = vadd.f32 %v714, %v728
  %v786 = vadd.f32 %v715, %v728
  %v787 = vadd.f32 %v716, %v728
  %v788 = vadd.f32 %v717, %v728
  %v789 = vadd.f32 %v718, %v728
  %v790 = vadd.f32 %v719, %v728
  %v791 = vadd.f32 %v720, %v728
  %v792 = vadd.f32 %v721, %v728
  %v793 = vadd.f32 %v722, %v728
  %vm794 = vcmp.gt.f32.partialorder %v730, 0.0
  %vm795 = vcmp.gt.f32.partialorder %v731, 0.0
  %vm796 = vcmp.gt.f32.partialorder %v732, 0.0
  %vm797 = vcmp.gt.f32.partialorder %v733, 0.0
  %vm798 = vcmp.gt.f32.partialorder %v734, 0.0
  %vm799 = vcmp.gt.f32.partialorder %v735, 0.0
  %vm800 = vcmp.gt.f32.partialorder %v736, 0.0
  %vm801 = vcmp.gt.f32.partialorder %v737, 0.0
  %vm802 = vcmp.gt.f32.partialorder %v738, 0.0
  %vm803 = vcmp.gt.f32.partialorder %v739, 0.0
  %vm804 = vcmp.gt.f32.partialorder %v740, 0.0
  %vm805 = vcmp.gt.f32.partialorder %v741, 0.0
  %vm806 = vcmp.gt.f32.partialorder %v742, 0.0
  %vm807 = vcmp.gt.f32.partialorder %v743, 0.0
  %vm808 = vcmp.gt.f32.partialorder %v744, 0.0
  %vm809 = vcmp.gt.f32.partialorder %v745, 0.0
  %vm810 = vcmp.gt.f32.partialorder %v746, 0.0
  %vm811 = vcmp.gt.f32.partialorder %v747, 0.0
  %vm812 = vcmp.gt.f32.partialorder %v748, 0.0
  %vm813 = vcmp.gt.f32.partialorder %v749, 0.0
  %vm814 = vcmp.gt.f32.partialorder %v750, 0.0
  %vm815 = vcmp.gt.f32.partialorder %v751, 0.0
  %vm816 = vcmp.gt.f32.partialorder %v752, 0.0
  %vm817 = vcmp.gt.f32.partialorder %v753, 0.0
  %vm818 = vcmp.gt.f32.partialorder %v754, 0.0
  %vm819 = vcmp.gt.f32.partialorder %v755, 0.0
  %vm820 = vcmp.gt.f32.partialorder %v756, 0.0
  %vm821 = vcmp.gt.f32.partialorder %v757, 0.0
  %vm822 = vcmp.gt.f32.partialorder %v758, 0.0
  %vm823 = vcmp.gt.f32.partialorder %v759, 0.0
  %vm824 = vcmp.gt.f32.partialorder %v760, 0.0
  %vm825 = vcmp.gt.f32.partialorder %v761, 0.0
  %vm826 = vcmp.gt.f32.partialorder %v762, 0.0
  %vm827 = vcmp.gt.f32.partialorder %v763, 0.0
  %vm828 = vcmp.gt.f32.partialorder %v764, 0.0
  %vm829 = vcmp.gt.f32.partialorder %v765, 0.0
  %vm830 = vcmp.gt.f32.partialorder %v766, 0.0
  %vm831 = vcmp.gt.f32.partialorder %v767, 0.0
  %vm832 = vcmp.gt.f32.partialorder %v768, 0.0
  %vm833 = vcmp.gt.f32.partialorder %v769, 0.0
  %vm834 = vcmp.gt.f32.partialorder %v770, 0.0
  %vm835 = vcmp.gt.f32.partialorder %v771, 0.0
  %vm836 = vcmp.gt.f32.partialorder %v772, 0.0
  %vm837 = vcmp.gt.f32.partialorder %v773, 0.0
  %vm838 = vcmp.gt.f32.partialorder %v774, 0.0
  %vm839 = vcmp.gt.f32.partialorder %v775, 0.0
  %vm840 = vcmp.gt.f32.partialorder %v776, 0.0
  %vm841 = vcmp.gt.f32.partialorder %v777, 0.0
  %vm842 = vcmp.gt.f32.partialorder %v778, 0.0
  %vm843 = vcmp.gt.f32.partialorder %v779, 0.0
  %vm844 = vcmp.gt.f32.partialorder %v780, 0.0
  %vm845 = vcmp.gt.f32.partialorder %v781, 0.0
  %vm846 = vcmp.gt.f32.partialorder %v782, 0.0
  %vm847 = vcmp.gt.f32.partialorder %v783, 0.0
  %vm848 = vcmp.gt.f32.partialorder %v784, 0.0
  %vm849 = vcmp.gt.f32.partialorder %v785, 0.0
  %vm850 = vcmp.gt.f32.partialorder %v786, 0.0
  %vm851 = vcmp.gt.f32.partialorder %v787, 0.0
  %vm852 = vcmp.gt.f32.partialorder %v788, 0.0
  %vm853 = vcmp.gt.f32.partialorder %v789, 0.0
  %vm854 = vcmp.gt.f32.partialorder %v790, 0.0
  %vm855 = vcmp.gt.f32.partialorder %v791, 0.0
  %vm856 = vcmp.gt.f32.partialorder %v792, 0.0
  %vm857 = vcmp.gt.f32.partialorder %v793, 0.0
  %v858 = vmul.f32 %v730, 0.1
  %v859 = vmul.f32 %v731, 0.1
  %v860 = vmul.f32 %v732, 0.1
  %v861 = vmul.f32 %v733, 0.1
  %v862 = vmul.f32 %v734, 0.1
  %v863 = vmul.f32 %v735, 0.1
  %v864 = vmul.f32 %v736, 0.1
  %v865 = vmul.f32 %v737, 0.1
  %v866 = vmul.f32 %v738, 0.1
  %v867 = vmul.f32 %v739, 0.1
  %v868 = vmul.f32 %v740, 0.1
  %v869 = vmul.f32 %v741, 0.1
  %v870 = vmul.f32 %v742, 0.1
  %v871 = vmul.f32 %v743, 0.1
  %v872 = vmul.f32 %v744, 0.1
  %v873 = vmul.f32 %v745, 0.1
  %v874 = vmul.f32 %v746, 0.1
  %v875 = vmul.f32 %v747, 0.1
  %v876 = vmul.f32 %v748, 0.1
  %v877 = vmul.f32 %v749, 0.1
  %v878 = vmul.f32 %v750, 0.1
  %v879 = vmul.f32 %v751, 0.1
  %v880 = vmul.f32 %v752, 0.1
  %v881 = vmul.f32 %v753, 0.1
  %v882 = vmul.f32 %v754, 0.1
  %v883 = vmul.f32 %v755, 0.1
  %v884 = vmul.f32 %v756, 0.1
  %v885 = vmul.f32 %v757, 0.1
  %v886 = vmul.f32 %v758, 0.1
  %v887 = vmul.f32 %v759, 0.1
  %v888 = vmul.f32 %v760, 0.1
  %v889 = vmul.f32 %v761, 0.1
  %v890 = vmul.f32 %v762, 0.1
  %v891 = vmul.f32 %v763, 0.1
  %v892 = vmul.f32 %v764, 0.1
  %v893 = vmul.f32 %v765, 0.1
  %v894 = vmul.f32 %v766, 0.1
  %v895 = vmul.f32 %v767, 0.1
  %v896 = vmul.f32 %v768, 0.1
  %v897 = vmul.f32 %v769, 0.1
  %v898 = vmul.f32 %v770, 0.1
  %v899 = vmul.f32 %v771, 0.1
  %v900 = vmul.f32 %v772, 0.1
  %v901 = vmul.f32 %v773, 0.1
  %v902 = vmul.f32 %v774, 0.1
  %v903 = vmul.f32 %v775, 0.1
  %v904 = vmul.f32 %v776, 0.1
  %v905 = vmul.f32 %v777, 0.1
  %v906 = vmul.f32 %v778, 0.1
  %v907 = vmul.f32 %v779, 0.1
  %v908 = vmul.f32 %v780, 0.1
  %v909 = vmul.f32 %v781, 0.1
  %v910 = vmul.f32 %v782, 0.1
  %v911 = vmul.f32 %v783, 0.1
  %v912 = vmul.f32 %v784, 0.1
  %v913 = vmul.f32 %v785, 0.1
  %v914 = vmul.f32 %v786, 0.1
  %v915 = vmul.f32 %v787, 0.1
  %v916 = vmul.f32 %v788, 0.1
  %v917 = vmul.f32 %v789, 0.1
  %v918 = vmul.f32 %v790, 0.1
  %v919 = vmul.f32 %v791, 0.1
  %v920 = vmul.f32 %v792, 0.1
  %v921 = vmul.f32 %v793, 0.1
  %v922 = vsel %vm794, %v730, %v858
  %v923 = vsel %vm795, %v731, %v859
  %v924 = vsel %vm796, %v732, %v860
  %v925 = vsel %vm797, %v733, %v861
  %v926 = vsel %vm798, %v734, %v862
  %v927 = vsel %vm799, %v735, %v863
  %v928 = vsel %vm800, %v736, %v864
  %v929 = vsel %vm801, %v737, %v865
  %v930 = vsel %vm802, %v738, %v866
  %v931 = vsel %vm803, %v739, %v867
  %v932 = vsel %vm804, %v740, %v868
  %v933 = vsel %vm805, %v741, %v869
  %v934 = vsel %vm806, %v742, %v870
  %v935 = vsel %vm807, %v743, %v871
  %v936 = vsel %vm808, %v744, %v872
  %v937 = vsel %vm809, %v745, %v873
  %v938 = vsel %vm810, %v746, %v874
  %v939 = vsel %vm811, %v747, %v875
  %v940 = vsel %vm812, %v748, %v876
  %v941 = vsel %vm813, %v749, %v877
  %v942 = vsel %vm814, %v750, %v878
  %v943 = vsel %vm815, %v751, %v879
  %v944 = vsel %vm816, %v752, %v880
  %v945 = vsel %vm817, %v753, %v881
  %v946 = vsel %vm818, %v754, %v882
  %v947 = vsel %vm819, %v755, %v883
  %v948 = vsel %vm820, %v756, %v884
  %v949 = vsel %vm821, %v757, %v885
  %v950 = vsel %vm822, %v758, %v886
  %v951 = vsel %vm823, %v759, %v887
  %v952 = vsel %vm824, %v760, %v888
  %v953 = vsel %vm825, %v761, %v889
  %v954 = vsel %vm826, %v762, %v890
  %v955 = vsel %vm827, %v763, %v891
  %v956 = vsel %vm828, %v764, %v892
  %v957 = vsel %vm829, %v765, %v893
  %v958 = vsel %vm830, %v766, %v894
  %v959 = vsel %vm831, %v767, %v895
  %v960 = vsel %vm832, %v768, %v896
  %v961 = vsel %vm833, %v769, %v897
  %v962 = vsel %vm834, %v770, %v898
  %v963 = vsel %vm835, %v771, %v899
  %v964 = vsel %vm836, %v772, %v900
  %v965 = vsel %vm837, %v773, %v901
  %v966 = vsel %vm838, %v774, %v902
  %v967 = vsel %vm839, %v775, %v903
  %v968 = vsel %vm840, %v776, %v904
  %v969 = vsel %vm841, %v777, %v905
  %v970 = vsel %vm842, %v778, %v906
  %v971 = vsel %vm843, %v779, %v907
  %v972 = vsel %vm844, %v780, %v908
  %v973 = vsel %vm845, %v781, %v909
  %v974 = vsel %vm846, %v782, %v910
  %v975 = vsel %vm847, %v783, %v911
  %v976 = vsel %vm848, %v784, %v912
  %v977 = vsel %vm849, %v785, %v913
  %v978 = vsel %vm850, %v786, %v914
  %v979 = vsel %vm851, %v787, %v915
  %v980 = vsel %vm852, %v788, %v916
  %v981 = vsel %vm853, %v789, %v917
  %v982 = vsel %vm854, %v790, %v918
  %v983 = vsel %vm855, %v791, %v919
  %v984 = vsel %vm856, %v792, %v920
  %v985 = vsel %vm857, %v793, %v921
  %986 = vst [vmem:[%s4] sm:$0xff] %v922
  %987 = vst [vmem:[%s4 + $0x8] sm:$0xff] %v923
  %988 = vst [vmem:[%s4 + $0x10] sm:$0xff] %v924
  %989 = vst [vmem:[%s4 + $0x18] sm:$0xff] %v925
  %990 = vst [vmem:[%s4 + $0x20] sm:$0xff] %v926
  %991 = vst [vmem:[%s4 + $0x28] sm:$0xff] %v927
  %992 = vst [vmem:[%s4 + $0x30] sm:$0xff] %v928
  %993 = vst [vmem:[%s4 + $0x38] sm:$0xff] %v929
  %994 = vst [vmem:[%s4 + $0x40] sm:$0xff] %v930
  %995 = vst [vmem:[%s4 + $0x48] sm:$0xff] %v931
  %996 = vst [vmem:[%s4 + $0x50] sm:$0xff] %v932
  %997 = vst [vmem:[%s4 + $0x58] sm:$0xff] %v933
  %998 = vst [vmem:[%s4 + $0x60] sm:$0xff] %v934
  %999 = vst [vmem:[%s4 + $0x68] sm:$0xff] %v935
  %1000 = vst [vmem:[%s4 + $0x70] sm:$0xff] %v936
  %1001 = vst [vmem:[%s4 + $0x78] sm:$0xff] %v937
  %1002 = vst [vmem:[%s4 + $0x80] sm:$0xff] %v938
  %1003 = vst [vmem:[%s4 + $0x88] sm:$0xff] %v939
  %1004 = vst [vmem:[%s4 + $0x90] sm:$0xff] %v940
  %1005 = vst [vmem:[%s4 + $0x98] sm:$0xff] %v941
  %1006 = vst [vmem:[%s4 + $0xa0] sm:$0xff] %v942
  %1007 = vst [vmem:[%s4 + $0xa8] sm:$0xff] %v943
  %1008 = vst [vmem:[%s4 + $0xb0] sm:$0xff] %v944
  %1009 = vst [vmem:[%s4 + $0xb8] sm:$0xff] %v945
  %1010 = vst [vmem:[%s4 + $0xc0] sm:$0xff] %v946
  %1011 = vst [vmem:[%s4 + $0xc8] sm:$0xff] %v947
  %1012 = vst [vmem:[%s4 + $0xd0] sm:$0xff] %v948
  %1013 = vst [vmem:[%s4 + $0xd8] sm:$0xff] %v949
  %1014 = vst [vmem:[%s4 + $0xe0] sm:$0xff] %v950
  %1015 = vst [vmem:[%s4 + $0xe8] sm:$0xff] %v951
  %1016 = vst [vmem:[%s4 + $0xf0] sm:$0xff] %v952
  %1017 = vst [vmem:[%s4 + $0xf8] sm:$0xff] %v953
  %1018 = vst [vmem:[%s4 + $0x100] sm:$0xff] %v954
  %1019 = vst [vmem:[%s4 + $0x108] sm:$0xff] %v955
  %1020 = vst [vmem:[%s4 + $0x110] sm:$0xff] %v956
  %1021 = vst [vmem:[%s4 + $0x118] sm:$0xff] %v957
  %1022 = vst [vmem:[%s4 + $0x120] sm:$0xff] %v958
  %1023 = vst [vmem:[%s4 + $0x128] sm:$0xff] %v959
  %1024 = vst [vmem:[%s4 + $0x130] sm:$0xff] %v960
  %1025 = vst [vmem:[%s4 + $0x138] sm:$0xff] %v961
  %1026 = vst [vmem:[%s4 + $0x140] sm:$0xff] %v962
  %1027 = vst [vmem:[%s4 + $0x148] sm:$0xff] %v963
  %1028 = vst [vmem:[%s4 + $0x150] sm:$0xff] %v964
  %1029 = vst [vmem:[%s4 + $0x158] sm:$0xff] %v965
  %1030 = vst [vmem:[%s4 + $0x160] sm:$0xff] %v966
  %1031 = vst [vmem:[%s4 + $0x168] sm:$0xff] %v967
  %1032 = vst [vmem:[%s4 + $0x170] sm:$0xff] %v968
  %1033 = vst [vmem:[%s4 + $0x178] sm:$0xff] %v969
  %1034 = vst [vmem:[%s4 + $0x180] sm:$0xff] %v970
  %1035 = vst [vmem:[%s4 + $0x188] sm:$0xff] %v971
  %1036 = vst [vmem:[%s4 + $0x190] sm:$0xff] %v972
  %1037 = vst [vmem:[%s4 + $0x198] sm:$0xff] %v973
  %1038 = vst [vmem:[%s4 + $0x1a0] sm:$0xff] %v974
  %1039 = vst [vmem:[%s4 + $0x1a8] sm:$0xff] %v975
  %1040 = vst [vmem:[%s4 + $0x1b0] sm:$0xff] %v976
  %1041 = vst [vmem:[%s4 + $0x1b8] sm:$0xff] %v977
  %1042 = vst [vmem:[%s4 + $0x1c0] sm:$0xff] %v978
  %1043 = vst [vmem:[%s4 + $0x1c8] sm:$0xff] %v979
  %1044 = vst [vmem:[%s4 + $0x1d0] sm:$0xff] %v980
  %1045 = vst [vmem:[%s4 + $0x1d8] sm:$0xff] %v981
  %1046 = vst [vmem:[%s4 + $0x1e0] sm:$0xff] %v982
  %1047 = vst [vmem:[%s4 + $0x1e8] sm:$0xff] %v983
  %1048 = vst [vmem:[%s4 + $0x1f0] sm:$0xff] %v984
  %1049 = vst [vmem:[%s4 + $0x1f8] sm:$0xff] %v985
  // Predicated region
  $region18: #{cnn_block.3} parent=0 // pred_check
    _
  $region19: #{cnn_block.3} parent=0 // pred_check_branch
    %1051 = sbr.rel (0) target = $region21
  $region20: #{cnn_block.3} parent=0 // pred_region
    _
  $region21: #{cnn_block.3} parent=0 // pred_fallthru
    _
  // Predicated region
  $region22: #{cnn_block.3} parent=0 // pred_check
    _
  $region23: #{cnn_block.3} parent=0 // pred_check_branch
    %1053 = sbr.rel (0) target = $region25
  $region24: #{cnn_block.3} parent=0 // pred_region
    _
  $region25: #{cnn_block.3} parent=0 // pred_fallthru
    _

// kernel: cnn_block.2
$region0: #{cnn_block.2}
  #allocation0 [shape = 'u32[]', space=smem, size = 0x4, offset = 0x4, fixed_abs, tag = 'smem constant byte address 0x4 - core index']
  #allocation1 [shape = 'u32[144,128]{1,0:T(1,128)}', space=vmem, size = 0x12000, scoped, tag = 'internal scratch']
  %s0 = inlined_call_operand.vmem [shape: bf16[512,40], index: 0, kind: input, shape index: {}]
  %s1 = inlined_call_operand.vmem [shape: bf16[40,128], index: 1, kind: input, shape index: {}]
  %s2 = inlined_call_operand.vmem [shape: f32[1,8,128], index: 2, kind: output, shape index: {}]
  %s3 = sld [smem:[#allocation0]]
  $region18: #{cnn_block.2} parent=0
    _
  %s5 = ssub.s32 1, %s3
  %s6 = scalar_select 0, %s5, %s3
  // Predicated region
  $region2: #{cnn_block.2} parent=0 // pred_check
    _
  $region3: #{cnn_block.2} parent=0 // pred_check_branch
    %8 = sbr.rel (0) target = $region5
  $region4: #{cnn_block.2} parent=0 // pred_region
    _
  $region5: #{cnn_block.2} parent=0 // pred_fallthru
    _
  // Predicated region
  $region6: #{cnn_block.2} parent=0 // pred_check
    _
  $region7: #{cnn_block.2} parent=0 // pred_check_branch
    %10 = sbr.rel (0) target = $region9
  $region8: #{cnn_block.2} parent=0 // pred_region
    _
  $region9: #{cnn_block.2} parent=0 // pred_fallthru
    _
  %v12 = vld [vmem:[%s0] sm:$0xf]
  %v13 = vld [vmem:[%s0 + $0x4] sm:$0xf]
  %v14 = vld [vmem:[%s0 + $0x8] sm:$0xf]
  %v15 = vld [vmem:[%s0 + $0xc] sm:$0xf]
  %v16 = vld [vmem:[%s0 + $0x10] sm:$0xf]
  %v17 = vld [vmem:[%s0 + $0x14] sm:$0xf]
  %v18 = vld [vmem:[%s0 + $0x18] sm:$0xf]
  %v19 = vld [vmem:[%s0 + $0x1c] sm:$0xf]
  %v20 = vld [vmem:[%s0 + $0x20] sm:$0xf]
  %v21 = vld [vmem:[%s0 + $0x24] sm:$0xf]
  %v22 = vld [vmem:[%s0 + $0x28] sm:$0xf]
  %v23 = vld [vmem:[%s0 + $0x2c] sm:$0xf]
  %v24 = vld [vmem:[%s0 + $0x30] sm:$0xf]
  %v25 = vld [vmem:[%s0 + $0x34] sm:$0xf]
  %v26 = vld [vmem:[%s0 + $0x38] sm:$0xf]
  %v27 = vld [vmem:[%s0 + $0x3c] sm:$0xf]
  %v28 = vld [vmem:[%s0 + $0x40] sm:$0xf]
  %v29 = vld [vmem:[%s0 + $0x44] sm:$0xf]
  %v30 = vld [vmem:[%s0 + $0x48] sm:$0xf]
  %v31 = vld [vmem:[%s0 + $0x4c] sm:$0xf]
  %v32 = vld [vmem:[%s0 + $0x50] sm:$0xf]
  %v33 = vld [vmem:[%s0 + $0x54] sm:$0xf]
  %v34 = vld [vmem:[%s0 + $0x58] sm:$0xf]
  %v35 = vld [vmem:[%s0 + $0x5c] sm:$0xf]
  %v36 = vld [vmem:[%s0 + $0x60] sm:$0xf]
  %v37 = vld [vmem:[%s0 + $0x64] sm:$0xf]
  %v38 = vld [vmem:[%s0 + $0x68] sm:$0xf]
  %v39 = vld [vmem:[%s0 + $0x6c] sm:$0xf]
  %v40 = vld [vmem:[%s0 + $0x70] sm:$0xf]
  %v41 = vld [vmem:[%s0 + $0x74] sm:$0xf]
  %v42 = vld [vmem:[%s0 + $0x78] sm:$0xf]
  %v43 = vld [vmem:[%s0 + $0x7c] sm:$0xf]
  %v44 = vld [vmem:[%s0 + $0x80] sm:$0xf]
  %v45 = vld [vmem:[%s0 + $0x84] sm:$0xf]
  %v46 = vld [vmem:[%s0 + $0x88] sm:$0xf]
  %v47 = vld [vmem:[%s0 + $0x8c] sm:$0xf]
  %v48 = vld [vmem:[%s0 + $0x90] sm:$0xf]
  %v49 = vld [vmem:[%s0 + $0x94] sm:$0xf]
  %v50 = vld [vmem:[%s0 + $0x98] sm:$0xf]
  %v51 = vld [vmem:[%s0 + $0x9c] sm:$0xf]
  %v52 = vld [vmem:[%s0 + $0xa0] sm:$0xf]
  %v53 = vld [vmem:[%s0 + $0xa4] sm:$0xf]
  %v54 = vld [vmem:[%s0 + $0xa8] sm:$0xf]
  %v55 = vld [vmem:[%s0 + $0xac] sm:$0xf]
  %v56 = vld [vmem:[%s0 + $0xb0] sm:$0xf]
  %v57 = vld [vmem:[%s0 + $0xb4] sm:$0xf]
  %v58 = vld [vmem:[%s0 + $0xb8] sm:$0xf]
  %v59 = vld [vmem:[%s0 + $0xbc] sm:$0xf]
  %v60 = vld [vmem:[%s0 + $0xc0] sm:$0xf]
  %v61 = vld [vmem:[%s0 + $0xc4] sm:$0xf]
  %v62 = vld [vmem:[%s0 + $0xc8] sm:$0xf]
  %v63 = vld [vmem:[%s0 + $0xcc] sm:$0xf]
  %v64 = vld [vmem:[%s0 + $0xd0] sm:$0xf]
  %v65 = vld [vmem:[%s0 + $0xd4] sm:$0xf]
  %v66 = vld [vmem:[%s0 + $0xd8] sm:$0xf]
  %v67 = vld [vmem:[%s0 + $0xdc] sm:$0xf]
  %v68 = vld [vmem:[%s0 + $0xe0] sm:$0xf]
  %v69 = vld [vmem:[%s0 + $0xe4] sm:$0xf]
  %v70 = vld [vmem:[%s0 + $0xe8] sm:$0xf]
  %v71 = vld [vmem:[%s0 + $0xec] sm:$0xf]
  %v72 = vld [vmem:[%s0 + $0xf0] sm:$0xf]
  %v73 = vld [vmem:[%s0 + $0xf4] sm:$0xf]
  %v74 = vld [vmem:[%s0 + $0xf8] sm:$0xf]
  %v75 = vld [vmem:[%s0 + $0xfc] sm:$0xf]
  %v76 = vld [vmem:[%s1] sm:$0xf]
  %v77 = vld [vmem:[%s1 + $0x4] sm:$0xf]
  %v78 = vld [vmem:[%s1 + $0x8] sm:$0xf]
  %v79 = vld [vmem:[%s1 + $0xc] sm:$0xf]
  %v80 = vld [vmem:[%s1 + $0x10] sm:$0xf]
  %v145 = vunpack.c.l.b16 %v12
  %v146 = vunpack.c.l.b16 %v13
  %v147 = vunpack.c.l.b16 %v14
  %v148 = vunpack.c.l.b16 %v15
  %v149 = vunpack.c.l.b16 %v16
  %v150 = vunpack.c.l.b16 %v17
  %v151 = vunpack.c.l.b16 %v18
  %v152 = vunpack.c.l.b16 %v19
  %v153 = vunpack.c.l.b16 %v20
  %v154 = vunpack.c.l.b16 %v21
  %v155 = vunpack.c.l.b16 %v22
  %v156 = vunpack.c.l.b16 %v23
  %v157 = vunpack.c.l.b16 %v24
  %v158 = vunpack.c.l.b16 %v25
  %v159 = vunpack.c.l.b16 %v26
  %v160 = vunpack.c.l.b16 %v27
  %v161 = vunpack.c.l.b16 %v28
  %v162 = vunpack.c.l.b16 %v29
  %v163 = vunpack.c.l.b16 %v30
  %v164 = vunpack.c.l.b16 %v31
  %v165 = vunpack.c.l.b16 %v32
  %v166 = vunpack.c.l.b16 %v33
  %v167 = vunpack.c.l.b16 %v34
  %v168 = vunpack.c.l.b16 %v35
  %v169 = vunpack.c.l.b16 %v36
  %v170 = vunpack.c.l.b16 %v37
  %v171 = vunpack.c.l.b16 %v38
  %v172 = vunpack.c.l.b16 %v39
  %v173 = vunpack.c.l.b16 %v40
  %v174 = vunpack.c.l.b16 %v41
  %v175 = vunpack.c.l.b16 %v42
  %v176 = vunpack.c.l.b16 %v43
  %v177 = vunpack.c.l.b16 %v44
  %v178 = vunpack.c.l.b16 %v45
  %v179 = vunpack.c.l.b16 %v46
  %v180 = vunpack.c.l.b16 %v47
  %v181 = vunpack.c.l.b16 %v48
  %v182 = vunpack.c.l.b16 %v49
  %v183 = vunpack.c.l.b16 %v50
  %v184 = vunpack.c.l.b16 %v51
  %v185 = vunpack.c.l.b16 %v52
  %v186 = vunpack.c.l.b16 %v53
  %v187 = vunpack.c.l.b16 %v54
  %v188 = vunpack.c.l.b16 %v55
  %v189 = vunpack.c.l.b16 %v56
  %v190 = vunpack.c.l.b16 %v57
  %v191 = vunpack.c.l.b16 %v58
  %v192 = vunpack.c.l.b16 %v59
  %v193 = vunpack.c.l.b16 %v60
  %v194 = vunpack.c.l.b16 %v61
  %v195 = vunpack.c.l.b16 %v62
  %v196 = vunpack.c.l.b16 %v63
  %v197 = vunpack.c.l.b16 %v64
  %v198 = vunpack.c.l.b16 %v65
  %v199 = vunpack.c.l.b16 %v66
  %v200 = vunpack.c.l.b16 %v67
  %v201 = vunpack.c.l.b16 %v68
  %v202 = vunpack.c.l.b16 %v69
  %v203 = vunpack.c.l.b16 %v70
  %v204 = vunpack.c.l.b16 %v71
  %v205 = vunpack.c.l.b16 %v72
  %v206 = vunpack.c.l.b16 %v73
  %v207 = vunpack.c.l.b16 %v74
  %v208 = vunpack.c.l.b16 %v75
  %v209 = vpack.c.b16 %v146, %v145
  %v210 = vpack.c.b16 %v148, %v147
  %v211 = vpack.c.b16 %v150, %v149
  %v212 = vpack.c.b16 %v152, %v151
  %v213 = vpack.c.b16 %v154, %v153
  %v214 = vpack.c.b16 %v156, %v155
  %v215 = vpack.c.b16 %v158, %v157
  %v216 = vpack.c.b16 %v160, %v159
  %v217 = vpack.c.b16 %v162, %v161
  %v218 = vpack.c.b16 %v164, %v163
  %v219 = vpack.c.b16 %v166, %v165
  %v220 = vpack.c.b16 %v168, %v167
  %v221 = vpack.c.b16 %v170, %v169
  %v222 = vpack.c.b16 %v172, %v171
  %v223 = vpack.c.b16 %v174, %v173
  %v224 = vpack.c.b16 %v176, %v175
  %v225 = vpack.c.b16 %v178, %v177
  %v226 = vpack.c.b16 %v180, %v179
  %v227 = vpack.c.b16 %v182, %v181
  %v228 = vpack.c.b16 %v184, %v183
  %v229 = vpack.c.b16 %v186, %v185
  %v230 = vpack.c.b16 %v188, %v187
  %v231 = vpack.c.b16 %v190, %v189
  %v232 = vpack.c.b16 %v192, %v191
  %v233 = vpack.c.b16 %v194, %v193
  %v234 = vpack.c.b16 %v196, %v195
  %v235 = vpack.c.b16 %v198, %v197
  %v236 = vpack.c.b16 %v200, %v199
  %v237 = vpack.c.b16 %v202, %v201
  %v238 = vpack.c.b16 %v204, %v203
  %v239 = vpack.c.b16 %v206, %v205
  %v240 = vpack.c.b16 %v208, %v207
  %v246 = vunpack.c.l.b16 %v76
  %v247 = vunpack.c.l.b16 %v77
  %v248 = vunpack.c.l.b16 %v78
  %v249 = vunpack.c.l.b16 %v79
  %v250 = vunpack.c.l.b16 %v80
  %v251 = vpack.c.b16 %v247, %v246
  %v252 = vpack.c.b16 %v249, %v248
  %v253 = vpack.c.b16 %v250, %v250
  %vm256 = vcmask 326656
  %v258 = vsel %vm256, %v209, 0
  %v261 = vsel %vm256, %v210, 0
  %v264 = vsel %vm256, %v211, 0
  %v267 = vsel %vm256, %v212, 0
  %v270 = vsel %vm256, %v213, 0
  %v273 = vsel %vm256, %v214, 0
  %v276 = vsel %vm256, %v215, 0
  %v279 = vsel %vm256, %v216, 0
  %v282 = vsel %vm256, %v217, 0
  %v285 = vsel %vm256, %v218, 0
  %v288 = vsel %vm256, %v219, 0
  %v291 = vsel %vm256, %v220, 0
  %v294 = vsel %vm256, %v221, 0
  %v297 = vsel %vm256, %v222, 0
  %v300 = vsel %vm256, %v223, 0
  %v303 = vsel %vm256, %v224, 0
  %v306 = vsel %vm256, %v225, 0
  %v309 = vsel %vm256, %v226, 0
  %v312 = vsel %vm256, %v227, 0
  %v315 = vsel %vm256, %v228, 0
  %v318 = vsel %vm256, %v229, 0
  %v321 = vsel %vm256, %v230, 0
  %v324 = vsel %vm256, %v231, 0
  %v327 = vsel %vm256, %v232, 0
  %v330 = vsel %vm256, %v233, 0
  %v333 = vsel %vm256, %v234, 0
  %v336 = vsel %vm256, %v235, 0
  %v339 = vsel %vm256, %v236, 0
  %v342 = vsel %vm256, %v237, 0
  %v345 = vsel %vm256, %v238, 0
  %v348 = vsel %vm256, %v239, 0
  %v351 = vsel %vm256, %v240, 0
  %vm353 = vcmask 1043456
  %v355 = vsel %vm353, %v253, 0
  %357 = vmatprep.subr.bf16.mxu0 0
  %358 = vmatpush1.bf16.msra.mxu0 %v251
  %359 = vmatprep.subr.bf16.mxu0 0
  %360 = vmatpush1.bf16.msra.mxu0 %v252
  %361 = vmatprep.subr.bf16.mxu0 0
  %362 = vmatpush1.bf16.msra.mxu0 %v355
  %363 = vmatprep.subr.bf16.mxu0 0
  %364 = vmatpush1.bf16.msra.mxu0 0
  %365 = vmatprep.subr.bf16.mxu0 0
  %366 = vmatpush1.bf16.msra.mxu0 0
  %367 = vmatprep.subr.bf16.mxu0 0
  %368 = vmatpush1.bf16.msra.mxu0 0
  %369 = vmatprep.subr.bf16.mxu0 0
  %370 = vmatpush1.bf16.msra.mxu0 0
  %371 = vmatprep.subr.bf16.mxu0 0
  %372 = vmatpush1.bf16.msra.mxu0 0
  %373 = vmatprep.subr.bf16.mxu0 0
  %374 = vmatpush1.bf16.msra.mxu0 0
  %375 = vmatprep.subr.bf16.mxu0 0
  %376 = vmatpush1.bf16.msra.mxu0 0
  %377 = vmatprep.subr.bf16.mxu0 0
  %378 = vmatpush1.bf16.msra.mxu0 0
  %379 = vmatprep.subr.bf16.mxu0 0
  %380 = vmatpush1.bf16.msra.mxu0 0
  %381 = vmatprep.subr.bf16.mxu0 0
  %382 = vmatpush1.bf16.msra.mxu0 0
  %383 = vmatprep.subr.bf16.mxu0 0
  %384 = vmatpush1.bf16.msra.mxu0 0
  %385 = vmatprep.subr.bf16.mxu0 0
  %386 = vmatpush1.bf16.msra.mxu0 0
  %387 = vmatprep.subr.bf16.mxu0 0
  %388 = vmatpush1.bf16.msra.mxu0 0
  %389 = vmatprep.mubr.bf16.mxu0 0
  %390 = vmatmul.mubr.bf16.gmra.mrb[0].mxu0 %v258
  %v391 = vpop.f32.mrb[0].mxu0
  %v392 = vadd.f32 0.0, %v391
  %v393 = vpop.f32.mrb[0].mxu0
  %v394 = vpop.f32.mrb[0].mxu0
  %v395 = vadd.f32 0.0, %v394
  %v396 = vpop.f32.mrb[0].mxu0
  %397 = vmatprep.mubr.bf16.mxu0 0
  %398 = vmatmul.mubr.bf16.gmra.mrb[0].mxu0 %v261
  %v399 = vpop.f32.mrb[0].mxu0
  %v400 = vadd.f32 0.0, %v399
  %v401 = vpop.f32.mrb[0].mxu0
  %v402 = vpop.f32.mrb[0].mxu0
  %v403 = vadd.f32 0.0, %v402
  %v404 = vpop.f32.mrb[0].mxu0
  %405 = vmatprep.mubr.bf16.mxu0 0
  %406 = vmatmul.mubr.bf16.gmra.mrb[0].mxu0 %v264
  %v407 = vpop.f32.mrb[0].mxu0
  %v408 = vadd.f32 0.0, %v407
  %v409 = vpop.f32.mrb[0].mxu0
  %v410 = vpop.f32.mrb[0].mxu0
  %v411 = vadd.f32 0.0, %v410
  %v412 = vpop.f32.mrb[0].mxu0
  %413 = vmatprep.mubr.bf16.mxu0 0
  %414 = vmatmul.mubr.bf16.gmra.mrb[0].mxu0 %v267
  %v415 = vpop.f32.mrb[0].mxu0
  %v416 = vadd.f32 0.0, %v415
  %v417 = vpop.f32.mrb[0].mxu0
  %v418 = vpop.f32.mrb[0].mxu0
  %v419 = vadd.f32 0.0, %v418
  %v420 = vpop.f32.mrb[0].mxu0
  %421 = vmatprep.mubr.bf16.mxu0 0
  %422 = vmatmul.mubr.bf16.gmra.mrb[0].mxu0 %v270
  %v423 = vpop.f32.mrb[0].mxu0
  %v424 = vadd.f32 0.0, %v423
  %v425 = vpop.f32.mrb[0].mxu0
  %v426 = vpop.f32.mrb[0].mxu0
  %v427 = vadd.f32 0.0, %v426
  %v428 = vpop.f32.mrb[0].mxu0
  %429 = vmatprep.mubr.bf16.mxu0 0
  %430 = vmatmul.mubr.bf16.gmra.mrb[0].mxu0 %v273
  %v431 = vpop.f32.mrb[0].mxu0
  %v432 = vadd.f32 0.0, %v431
  %v433 = vpop.f32.mrb[0].mxu0
  %v434 = vpop.f32.mrb[0].mxu0
  %v435 = vadd.f32 0.0, %v434
  %v436 = vpop.f32.mrb[0].mxu0
  %437 = vmatprep.mubr.bf16.mxu0 0
  %438 = vmatmul.mubr.bf16.gmra.mrb[0].mxu0 %v276
  %v439 = vpop.f32.mrb[0].mxu0
  %v440 = vadd.f32 0.0, %v439
  %v441 = vpop.f32.mrb[0].mxu0
  %v442 = vpop.f32.mrb[0].mxu0
  %v443 = vadd.f32 0.0, %v442
  %v444 = vpop.f32.mrb[0].mxu0
  %445 = vmatprep.mubr.bf16.mxu0 0
  %446 = vmatmul.mubr.bf16.gmra.mrb[0].mxu0 %v279
  %v447 = vpop.f32.mrb[0].mxu0
  %v448 = vadd.f32 0.0, %v447
  %v449 = vpop.f32.mrb[0].mxu0
  %v450 = vpop.f32.mrb[0].mxu0
  %v451 = vadd.f32 0.0, %v450
  %v452 = vpop.f32.mrb[0].mxu0
  %453 = vmatprep.mubr.bf16.mxu0 0
  %454 = vmatmul.mubr.bf16.gmra.mrb[0].mxu0 %v282
  %v455 = vpop.f32.mrb[0].mxu0
  %v456 = vadd.f32 0.0, %v455
  %v457 = vpop.f32.mrb[0].mxu0
  %v458 = vpop.f32.mrb[0].mxu0
  %v459 = vadd.f32 0.0, %v458
  %v460 = vpop.f32.mrb[0].mxu0
  %461 = vmatprep.mubr.bf16.mxu0 0
  %462 = vmatmul.mubr.bf16.gmra.mrb[0].mxu0 %v285
  %v463 = vpop.f32.mrb[0].mxu0
  %v464 = vadd.f32 0.0, %v463
  %v465 = vpop.f32.mrb[0].mxu0
  %v466 = vpop.f32.mrb[0].mxu0
  %v467 = vadd.f32 0.0, %v466
  %v468 = vpop.f32.mrb[0].mxu0
  %469 = vmatprep.mubr.bf16.mxu0 0
  %470 = vmatmul.mubr.bf16.gmra.mrb[0].mxu0 %v288
  %v471 = vpop.f32.mrb[0].mxu0
  %v472 = vadd.f32 0.0, %v471
  %v473 = vpop.f32.mrb[0].mxu0
  %v474 = vpop.f32.mrb[0].mxu0
  %v475 = vadd.f32 0.0, %v474
  %v476 = vpop.f32.mrb[0].mxu0
  %477 = vmatprep.mubr.bf16.mxu0 0
  %478 = vmatmul.mubr.bf16.gmra.mrb[0].mxu0 %v291
  %v479 = vpop.f32.mrb[0].mxu0
  %v480 = vadd.f32 0.0, %v479
  %v481 = vpop.f32.mrb[0].mxu0
  %v482 = vpop.f32.mrb[0].mxu0
  %v483 = vadd.f32 0.0, %v482
  %v484 = vpop.f32.mrb[0].mxu0
  %485 = vmatprep.mubr.bf16.mxu0 0
  %486 = vmatmul.mubr.bf16.gmra.mrb[0].mxu0 %v294
  %v487 = vpop.f32.mrb[0].mxu0
  %v488 = vadd.f32 0.0, %v487
  %v489 = vpop.f32.mrb[0].mxu0
  %v490 = vpop.f32.mrb[0].mxu0
  %v491 = vadd.f32 0.0, %v490
  %v492 = vpop.f32.mrb[0].mxu0
  %493 = vmatprep.mubr.bf16.mxu0 0
  %494 = vmatmul.mubr.bf16.gmra.mrb[0].mxu0 %v297
  %v495 = vpop.f32.mrb[0].mxu0
  %v496 = vadd.f32 0.0, %v495
  %v497 = vpop.f32.mrb[0].mxu0
  %v498 = vpop.f32.mrb[0].mxu0
  %v499 = vadd.f32 0.0, %v498
  %v500 = vpop.f32.mrb[0].mxu0
  %501 = vmatprep.mubr.bf16.mxu0 0
  %502 = vmatmul.mubr.bf16.gmra.mrb[0].mxu0 %v300
  %v503 = vpop.f32.mrb[0].mxu0
  %v504 = vadd.f32 0.0, %v503
  %v505 = vpop.f32.mrb[0].mxu0
  %v506 = vpop.f32.mrb[0].mxu0
  %v507 = vadd.f32 0.0, %v506
  %v508 = vpop.f32.mrb[0].mxu0
  %509 = vmatprep.mubr.bf16.mxu0 0
  %510 = vmatmul.mubr.bf16.gmra.mrb[0].mxu0 %v303
  %v511 = vpop.f32.mrb[0].mxu0
  %v512 = vadd.f32 0.0, %v511
  %v513 = vpop.f32.mrb[0].mxu0
  %v514 = vpop.f32.mrb[0].mxu0
  %v515 = vadd.f32 0.0, %v514
  %v516 = vpop.f32.mrb[0].mxu0
  %517 = vmatprep.mubr.bf16.mxu0 0
  %518 = vmatmul.mubr.bf16.gmra.mrb[0].mxu0 %v306
  %v519 = vpop.f32.mrb[0].mxu0
  %v520 = vadd.f32 0.0, %v519
  %v521 = vpop.f32.mrb[0].mxu0
  %v522 = vpop.f32.mrb[0].mxu0
  %v523 = vadd.f32 0.0, %v522
  %v524 = vpop.f32.mrb[0].mxu0
  %525 = vmatprep.mubr.bf16.mxu0 0
  %526 = vmatmul.mubr.bf16.gmra.mrb[0].mxu0 %v309
  %v527 = vpop.f32.mrb[0].mxu0
  %v528 = vadd.f32 0.0, %v527
  %v529 = vpop.f32.mrb[0].mxu0
  %v530 = vpop.f32.mrb[0].mxu0
  %v531 = vadd.f32 0.0, %v530
  %v532 = vpop.f32.mrb[0].mxu0
  %533 = vmatprep.mubr.bf16.mxu0 0
  %534 = vmatmul.mubr.bf16.gmra.mrb[0].mxu0 %v312
  %v535 = vpop.f32.mrb[0].mxu0
  %v536 = vadd.f32 0.0, %v535
  %v537 = vpop.f32.mrb[0].mxu0
  %v538 = vpop.f32.mrb[0].mxu0
  %v539 = vadd.f32 0.0, %v538
  %v540 = vpop.f32.mrb[0].mxu0
  %541 = vmatprep.mubr.bf16.mxu0 0
  %542 = vmatmul.mubr.bf16.gmra.mrb[0].mxu0 %v315
  %v543 = vpop.f32.mrb[0].mxu0
  %v544 = vadd.f32 0.0, %v543
  %v545 = vpop.f32.mrb[0].mxu0
  %v546 = vpop.f32.mrb[0].mxu0
  %v547 = vadd.f32 0.0, %v546
  %v548 = vpop.f32.mrb[0].mxu0
  %549 = vmatprep.mubr.bf16.mxu0 0
  %550 = vmatmul.mubr.bf16.gmra.mrb[0].mxu0 %v318
  %v551 = vpop.f32.mrb[0].mxu0
  %v552 = vadd.f32 0.0, %v551
  %v553 = vpop.f32.mrb[0].mxu0
  %v554 = vpop.f32.mrb[0].mxu0
  %v555 = vadd.f32 0.0, %v554
  %v556 = vpop.f32.mrb[0].mxu0
  %557 = vmatprep.mubr.bf16.mxu0 0
  %558 = vmatmul.mubr.bf16.gmra.mrb[0].mxu0 %v321
  %v559 = vpop.f32.mrb[0].mxu0
  %v560 = vadd.f32 0.0, %v559
  %v561 = vpop.f32.mrb[0].mxu0
  %v562 = vpop.f32.mrb[0].mxu0
  %v563 = vadd.f32 0.0, %v562
  %v564 = vpop.f32.mrb[0].mxu0
  %565 = vmatprep.mubr.bf16.mxu0 0
  %566 = vmatmul.mubr.bf16.gmra.mrb[0].mxu0 %v324
  %v567 = vpop.f32.mrb[0].mxu0
  %v568 = vadd.f32 0.0, %v567
  %v569 = vpop.f32.mrb[0].mxu0
  %v570 = vpop.f32.mrb[0].mxu0
  %v571 = vadd.f32 0.0, %v570
  %v572 = vpop.f32.mrb[0].mxu0
  %573 = vmatprep.mubr.bf16.mxu0 0
  %574 = vmatmul.mubr.bf16.gmra.mrb[0].mxu0 %v327
  %v575 = vpop.f32.mrb[0].mxu0
  %v576 = vadd.f32 0.0, %v575
  %v577 = vpop.f32.mrb[0].mxu0
  %v578 = vpop.f32.mrb[0].mxu0
  %v579 = vadd.f32 0.0, %v578
  %v580 = vpop.f32.mrb[0].mxu0
  %581 = vmatprep.mubr.bf16.mxu0 0
  %582 = vmatmul.mubr.bf16.gmra.mrb[0].mxu0 %v330
  %v583 = vpop.f32.mrb[0].mxu0
  %v584 = vadd.f32 0.0, %v583
  %v585 = vpop.f32.mrb[0].mxu0
  %v586 = vpop.f32.mrb[0].mxu0
  %v587 = vadd.f32 0.0, %v586
  %v588 = vpop.f32.mrb[0].mxu0
  %589 = vmatprep.mubr.bf16.mxu0 0
  %590 = vmatmul.mubr.bf16.gmra.mrb[0].mxu0 %v333
  %v591 = vpop.f32.mrb[0].mxu0
  %v592 = vadd.f32 0.0, %v591
  %v593 = vpop.f32.mrb[0].mxu0
  %v594 = vpop.f32.mrb[0].mxu0
  %v595 = vadd.f32 0.0, %v594
  %v596 = vpop.f32.mrb[0].mxu0
  %597 = vmatprep.mubr.bf16.mxu0 0
  %598 = vmatmul.mubr.bf16.gmra.mrb[0].mxu0 %v336
  %v599 = vpop.f32.mrb[0].mxu0
  %v600 = vadd.f32 0.0, %v599
  %v601 = vpop.f32.mrb[0].mxu0
  %v602 = vpop.f32.mrb[0].mxu0
  %v603 = vadd.f32 0.0, %v602
  %v604 = vpop.f32.mrb[0].mxu0
  %605 = vmatprep.mubr.bf16.mxu0 0
  %606 = vmatmul.mubr.bf16.gmra.mrb[0].mxu0 %v339
  %v607 = vpop.f32.mrb[0].mxu0
  %v608 = vadd.f32 0.0, %v607
  %v609 = vpop.f32.mrb[0].mxu0
  %v610 = vpop.f32.mrb[0].mxu0
  %v611 = vadd.f32 0.0, %v610
  %v612 = vpop.f32.mrb[0].mxu0
  %613 = vmatprep.mubr.bf16.mxu0 0
  %614 = vmatmul.mubr.bf16.gmra.mrb[0].mxu0 %v342
  %v615 = vpop.f32.mrb[0].mxu0
  %v616 = vadd.f32 0.0, %v615
  %v617 = vpop.f32.mrb[0].mxu0
  %v618 = vpop.f32.mrb[0].mxu0
  %v619 = vadd.f32 0.0, %v618
  %v620 = vpop.f32.mrb[0].mxu0
  %621 = vmatprep.mubr.bf16.mxu0 0
  %622 = vmatmul.mubr.bf16.gmra.mrb[0].mxu0 %v345
  %v623 = vpop.f32.mrb[0].mxu0
  %v624 = vadd.f32 0.0, %v623
  %v625 = vpop.f32.mrb[0].mxu0
  %v626 = vpop.f32.mrb[0].mxu0
  %v627 = vadd.f32 0.0, %v626
  %v628 = vpop.f32.mrb[0].mxu0
  %629 = vmatprep.mubr.bf16.mxu0 0
  %630 = vmatmul.mubr.bf16.gmra.mrb[0].mxu0 %v348
  %v631 = vpop.f32.mrb[0].mxu0
  %v632 = vadd.f32 0.0, %v631
  %v633 = vpop.f32.mrb[0].mxu0
  %v634 = vpop.f32.mrb[0].mxu0
  %v635 = vadd.f32 0.0, %v634
  %v636 = vpop.f32.mrb[0].mxu0
  %637 = vmatprep.mubr.bf16.mxu0 0
  %638 = vmatmul.mubr.bf16.gmra.mrb[0].mxu0 %v351
  %v639 = vpop.f32.mrb[0].mxu0
  %v640 = vadd.f32 0.0, %v639
  %v641 = vpop.f32.mrb[0].mxu0
  %v642 = vpop.f32.mrb[0].mxu0
  %v643 = vadd.f32 0.0, %v642
  %v644 = vpop.f32.mrb[0].mxu0
  %645 = vdwg.mxu0
  %v646 = vadd.f32 %v392, %v395
  %v647 = vadd.f32 %v646, %v400
  %v648 = vadd.f32 %v647, %v403
  %v649 = vadd.f32 %v648, %v408
  %v650 = vadd.f32 %v649, %v411
  %v651 = vadd.f32 %v650, %v416
  %v652 = vadd.f32 %v651, %v419
  %v653 = vadd.f32 %v652, %v424
  %v654 = vadd.f32 %v653, %v427
  %v655 = vadd.f32 %v654, %v432
  %v656 = vadd.f32 %v655, %v435
  %v657 = vadd.f32 %v656, %v440
  %v658 = vadd.f32 %v657, %v443
  %v659 = vadd.f32 %v658, %v448
  %v660 = vadd.f32 %v659, %v451
  %v661 = vadd.f32 %v660, %v456
  %v662 = vadd.f32 %v661, %v459
  %v663 = vadd.f32 %v662, %v464
  %v664 = vadd.f32 %v663, %v467
  %v665 = vadd.f32 %v664, %v472
  %v666 = vadd.f32 %v665, %v475
  %v667 = vadd.f32 %v666, %v480
  %v668 = vadd.f32 %v667, %v483
  %v669 = vadd.f32 %v668, %v488
  %v670 = vadd.f32 %v669, %v491
  %v671 = vadd.f32 %v670, %v496
  %v672 = vadd.f32 %v671, %v499
  %v673 = vadd.f32 %v672, %v504
  %v674 = vadd.f32 %v673, %v507
  %v675 = vadd.f32 %v674, %v512
  %v676 = vadd.f32 %v675, %v515
  %v677 = vadd.f32 %v676, %v520
  %v678 = vadd.f32 %v677, %v523
  %v679 = vadd.f32 %v678, %v528
  %v680 = vadd.f32 %v679, %v531
  %v681 = vadd.f32 %v680, %v536
  %v682 = vadd.f32 %v681, %v539
  %v683 = vadd.f32 %v682, %v544
  %v684 = vadd.f32 %v683, %v547
  %v685 = vadd.f32 %v684, %v552
  %v686 = vadd.f32 %v685, %v555
  %v687 = vadd.f32 %v686, %v560
  %v688 = vadd.f32 %v687, %v563
  %v689 = vadd.f32 %v688, %v568
  %v690 = vadd.f32 %v689, %v571
  %v691 = vadd.f32 %v690, %v576
  %v692 = vadd.f32 %v691, %v579
  %v693 = vadd.f32 %v692, %v584
  %v694 = vadd.f32 %v693, %v587
  %v695 = vadd.f32 %v694, %v592
  %v696 = vadd.f32 %v695, %v595
  %v697 = vadd.f32 %v696, %v600
  %v698 = vadd.f32 %v697, %v603
  %v699 = vadd.f32 %v698, %v608
  %v700 = vadd.f32 %v699, %v611
  %v701 = vadd.f32 %v700, %v616
  %v702 = vadd.f32 %v701, %v619
  %v703 = vadd.f32 %v702, %v624
  %v704 = vadd.f32 %v703, %v627
  %v705 = vadd.f32 %v704, %v632
  %v706 = vadd.f32 %v705, %v635
  %v707 = vadd.f32 %v706, %v640
  %v708 = vadd.f32 %v707, %v643
  %v709 = vrot.slane %v708, 4
  %v710 = vadd.f32 %v708, %v709
  %v711 = vrot.slane %v710, 2
  %v712 = vadd.f32 %v710, %v711
  %v713 = vrot.slane %v712, 1
  %v714 = vadd.f32 %v712, %v713
  %v715 = vmul.f32 %v392, %v392
  %v716 = vmul.f32 %v395, %v395
  %v717 = vmul.f32 %v400, %v400
  %v718 = vmul.f32 %v403, %v403
  %v719 = vmul.f32 %v408, %v408
  %v720 = vmul.f32 %v411, %v411
  %v721 = vmul.f32 %v416, %v416
  %v722 = vmul.f32 %v419, %v419
  %v723 = vmul.f32 %v424, %v424
  %v724 = vmul.f32 %v427, %v427
  %v725 = vmul.f32 %v432, %v432
  %v726 = vmul.f32 %v435, %v435
  %v727 = vmul.f32 %v440, %v440
  %v728 = vmul.f32 %v443, %v443
  %v729 = vmul.f32 %v448, %v448
  %v730 = vmul.f32 %v451, %v451
  %v731 = vmul.f32 %v456, %v456
  %v732 = vmul.f32 %v459, %v459
  %v733 = vmul.f32 %v464, %v464
  %v734 = vmul.f32 %v467, %v467
  %v735 = vmul.f32 %v472, %v472
  %v736 = vmul.f32 %v475, %v475
  %v737 = vmul.f32 %v480, %v480
  %v738 = vmul.f32 %v483, %v483
  %v739 = vmul.f32 %v488, %v488
  %v740 = vmul.f32 %v491, %v491
  %v741 = vmul.f32 %v496, %v496
  %v742 = vmul.f32 %v499, %v499
  %v743 = vmul.f32 %v504, %v504
  %v744 = vmul.f32 %v507, %v507
  %v745 = vmul.f32 %v512, %v512
  %v746 = vmul.f32 %v515, %v515
  %v747 = vmul.f32 %v520, %v520
  %v748 = vmul.f32 %v523, %v523
  %v749 = vmul.f32 %v528, %v528
  %v750 = vmul.f32 %v531, %v531
  %v751 = vmul.f32 %v536, %v536
  %v752 = vmul.f32 %v539, %v539
  %v753 = vmul.f32 %v544, %v544
  %v754 = vmul.f32 %v547, %v547
  %v755 = vmul.f32 %v552, %v552
  %v756 = vmul.f32 %v555, %v555
  %v757 = vmul.f32 %v560, %v560
  %v758 = vmul.f32 %v563, %v563
  %v759 = vmul.f32 %v568, %v568
  %v760 = vmul.f32 %v571, %v571
  %v761 = vmul.f32 %v576, %v576
  %v762 = vmul.f32 %v579, %v579
  %v763 = vmul.f32 %v584, %v584
  %v764 = vmul.f32 %v587, %v587
  %v765 = vmul.f32 %v592, %v592
  %v766 = vmul.f32 %v595, %v595
  %v767 = vmul.f32 %v600, %v600
  %v768 = vmul.f32 %v603, %v603
  %v769 = vmul.f32 %v608, %v608
  %v770 = vmul.f32 %v611, %v611
  %v771 = vmul.f32 %v616, %v616
  %v772 = vmul.f32 %v619, %v619
  %v773 = vmul.f32 %v624, %v624
  %v774 = vmul.f32 %v627, %v627
  %v775 = vmul.f32 %v632, %v632
  %v776 = vmul.f32 %v635, %v635
  %v777 = vmul.f32 %v640, %v640
  %v778 = vmul.f32 %v643, %v643
  %v779 = vadd.f32 %v715, %v716
  %v780 = vadd.f32 %v779, %v717
  %v781 = vadd.f32 %v780, %v718
  %v782 = vadd.f32 %v781, %v719
  %v783 = vadd.f32 %v782, %v720
  %v784 = vadd.f32 %v783, %v721
  %v785 = vadd.f32 %v784, %v722
  %v786 = vadd.f32 %v785, %v723
  %v787 = vadd.f32 %v786, %v724
  %v788 = vadd.f32 %v787, %v725
  %v789 = vadd.f32 %v788, %v726
  %v790 = vadd.f32 %v789, %v727
  %v791 = vadd.f32 %v790, %v728
  %v792 = vadd.f32 %v791, %v729
  %v793 = vadd.f32 %v792, %v730
  %v794 = vadd.f32 %v793, %v731
  %v795 = vadd.f32 %v794, %v732
  %v796 = vadd.f32 %v795, %v733
  %v797 = vadd.f32 %v796, %v734
  %v798 = vadd.f32 %v797, %v735
  %v799 = vadd.f32 %v798, %v736
  %v800 = vadd.f32 %v799, %v737
  %v801 = vadd.f32 %v800, %v738
  %v802 = vadd.f32 %v801, %v739
  %v803 = vadd.f32 %v802, %v740
  %v804 = vadd.f32 %v803, %v741
  %v805 = vadd.f32 %v804, %v742
  %v806 = vadd.f32 %v805, %v743
  %v807 = vadd.f32 %v806, %v744
  %v808 = vadd.f32 %v807, %v745
  %v809 = vadd.f32 %v808, %v746
  %v810 = vadd.f32 %v809, %v747
  %v811 = vadd.f32 %v810, %v748
  %v812 = vadd.f32 %v811, %v749
  %v813 = vadd.f32 %v812, %v750
  %v814 = vadd.f32 %v813, %v751
  %v815 = vadd.f32 %v814, %v752
  %v816 = vadd.f32 %v815, %v753
  %v817 = vadd.f32 %v816, %v754
  %v818 = vadd.f32 %v817, %v755
  %v819 = vadd.f32 %v818, %v756
  %v820 = vadd.f32 %v819, %v757
  %v821 = vadd.f32 %v820, %v758
  %v822 = vadd.f32 %v821, %v759
  %v823 = vadd.f32 %v822, %v760
  %v824 = vadd.f32 %v823, %v761
  %v825 = vadd.f32 %v824, %v762
  %v826 = vadd.f32 %v825, %v763
  %v827 = vadd.f32 %v826, %v764
  %v828 = vadd.f32 %v827, %v765
  %v829 = vadd.f32 %v828, %v766
  %v830 = vadd.f32 %v829, %v767
  %v831 = vadd.f32 %v830, %v768
  %v832 = vadd.f32 %v831, %v769
  %v833 = vadd.f32 %v832, %v770
  %v834 = vadd.f32 %v833, %v771
  %v835 = vadd.f32 %v834, %v772
  %v836 = vadd.f32 %v835, %v773
  %v837 = vadd.f32 %v836, %v774
  %v838 = vadd.f32 %v837, %v775
  %v839 = vadd.f32 %v838, %v776
  %v840 = vadd.f32 %v839, %v777
  %v841 = vadd.f32 %v840, %v778
  %v842 = vrot.slane %v841, 4
  %v843 = vadd.f32 %v841, %v842
  %v844 = vrot.slane %v843, 2
  %v845 = vadd.f32 %v843, %v844
  %v846 = vrot.slane %v845, 1
  %v847 = vadd.f32 %v845, %v846
  %vm848 = vcmask 1040384
  %v849 = vsel %vm848, %v714, %v847
  %vm850 = vcmask 1041408
  %v851 = vsel %vm850, %v849, 0.0
  %852 = vst [vmem:[%s2] sm:$0xff] %v851
  // Predicated region
  $region10: #{cnn_block.2} parent=0 // pred_check
    _
  $region11: #{cnn_block.2} parent=0 // pred_check_branch
    %854 = sbr.rel (0) target = $region13
  $region12: #{cnn_block.2} parent=0 // pred_region
    _
  $region13: #{cnn_block.2} parent=0 // pred_fallthru
    _
  // Predicated region
  $region14: #{cnn_block.2} parent=0 // pred_check
    _
  $region15: #{cnn_block.2} parent=0 // pred_check_branch
    %856 = sbr.rel (0) target = $region17
  $region16: #{cnn_block.2} parent=0 // pred_region
    _
  $region17: #{cnn_block.2} parent=0 // pred_fallthru
    _

</llo_original>
